<compile_context>
chip_gen: v7x
topology: tpu7x:2x2x1
jax: 0.10.0
libtpu: 0.0.40
codegen_flags: <defaults>
</compile_context>

<pallas_src>
import functools

import jax
import jax.numpy as jnp
from jax.experimental import pallas as pl
from jax.experimental.pallas import tpu as pltpu


# ----------------------------- Pallas kernel --------------------------------
def gcn_siamese_kernel(a_ref, x_ref,
                       w1_ref, b1_ref,
                       w2_ref, b2_ref,
                       w3_ref, b3_ref,
                       attw_ref,
                       fcw_ref, fcb_ref,
                       out_ref, *, gb, n):
    f32 = jnp.float32
    a = a_ref[0]                      # (M, M) block-diag normalized adjacency, M = gb*n
    x = x_ref[0]                      # (M, F0) node features of gb stacked graphs

    # ---- GCNConv 1 + ReLU (dropout is identity in eval mode) ----
    # Aggregate before transform: F0 < F1, so A runs over the narrow operand.
    h = jnp.dot(a, x, preferred_element_type=f32)                          # (M, F0)
    h = jnp.dot(h, w1_ref[...], preferred_element_type=f32) + b1_ref[...]  # (M, F1)
    h = jnp.maximum(h, 0.0)

    # ---- GCNConv 2 + ReLU ----
    h = jnp.dot(h, w2_ref[...], preferred_element_type=f32)
    h = jnp.dot(a, h, preferred_element_type=f32) + b2_ref[...]
    h = jnp.maximum(h, 0.0)

    # ---- GCNConv 3 + ReLU ----
    h = jnp.dot(h, w3_ref[...], preferred_element_type=f32)
    h = jnp.dot(a, h, preferred_element_type=f32) + b3_ref[...]
    h = jnp.maximum(h, 0.0)                                                # (M, F3)

    # ---- AttentionModule, per graph (rank-1 products on VPU/XLU, not MXU) ----
    hw = jnp.dot(h, attw_ref[...], preferred_element_type=f32)             # (M, F3)
    f3 = h.shape[-1]
    # Layout-preserving split of the sublane axis: n == 8 == one sublane tile.
    hg = h.reshape(gb, n, f3)                                              # (gb, n, F3)
    ctx = jnp.mean(hw.reshape(gb, n, f3), axis=1, keepdims=True)           # (gb, 1, F3)
    tg = jnp.tanh(ctx)                                                     # (gb, 1, F3)
    # sigmoid_scores = sigmoid(h_g @ tg_g^T): elementwise mul + lane reduce.
    scores = jax.nn.sigmoid(jnp.sum(hg * tg, axis=-1, keepdims=True))      # (gb, n, 1)
    # representation = (h_g^T @ scores_g)^T: elementwise mul + sublane reduce.
    rep = jnp.sum(scores * hg, axis=1)                                     # (gb, F3)

    # ---- fully_connected_first + ReLU ----
    out = jnp.dot(rep, fcw_ref[...], preferred_element_type=f32) + fcb_ref[...]
    out_ref[0] = jnp.maximum(out, 0.0)                                     # (gb, BN)


# ------------------------------ JAX wrapper ----------------------------------
def gcn_model_forward(x, a_hat, params, *, graphs_per_step=16):
    """x: (G, N, F0) float32 node features, a_hat: (G, N, N) normalized adjacency.
    Returns (G, bottle_neck)."""
    G, N, F0 = x.shape
    F1 = params["w1"].shape[1]
    F2 = params["w2"].shape[1]
    F3 = params["w3"].shape[1]
    BN = params["fc_w"].shape[1]

    gb = min(graphs_per_step, G)
    steps = pl.cdiv(G, gb)
    g_pad = steps * gb
    if g_pad != G:                     # pad with empty graphs (discarded at the end)
        x = jnp.concatenate([x, jnp.zeros((g_pad - G, N, F0), x.dtype)], axis=0)
        a_hat = jnp.concatenate([a_hat, jnp.zeros((g_pad - G, N, N), a_hat.dtype)], axis=0)
    M = gb * N                          # rows per grid step (128 with gb=16, N=8)

    # One block-diagonal adjacency per grid step: (steps, M, M).
    a_steps = a_hat.reshape(steps, gb, N, N)
    a_blk = jnp.einsum("sgij,gh->sgihj", a_steps,
                       jnp.eye(gb, dtype=a_hat.dtype)).reshape(steps, M, M)
    x_flat = x.reshape(steps, M, F0)

    def shared_spec(shape):
        # Weights/biases: same (whole-array) block at every grid step.
        return pl.BlockSpec(shape, lambda s: (0,) * len(shape))

    flops = steps * (2 * M * M * F0 + 2 * M * F0 * F1       # layer 1
                     + 2 * M * F1 * F2 + 2 * M * M * F2     # layer 2
                     + 2 * M * F2 * F3 + 2 * M * M * F3     # layer 3
                     + 2 * M * F3 * F3 + 6 * M * F3         # attention
                     + 2 * gb * F3 * BN + gb * BN)          # fc
    transcendentals = steps * (gb * F3 + M)                 # tanh + sigmoid
    bytes_accessed = 4 * (steps * (M * M + M * F0 + gb * BN)
                          + F0 * F1 + F1 * F2 + F2 * F3 + F3 * F3 + F3 * BN
                          + F1 + F2 + F3 + BN)

    out = pl.pallas_call(
        functools.partial(gcn_siamese_kernel, gb=gb, n=N),
        out_shape=jax.ShapeDtypeStruct((steps, gb, BN), jnp.float32),
        grid=(steps,),
        in_specs=[
            pl.BlockSpec((1, M, M), lambda s: (s, 0, 0)),     # block-diag adjacency
            pl.BlockSpec((1, M, F0), lambda s: (s, 0, 0)),    # node features
            shared_spec(params["w1"].shape), shared_spec(params["b1"].shape),
            shared_spec(params["w2"].shape), shared_spec(params["b2"].shape),
            shared_spec(params["w3"].shape), shared_spec(params["b3"].shape),
            shared_spec(params["att_w"].shape),
            shared_spec(params["fc_w"].shape), shared_spec(params["fc_b"].shape),
        ],
        out_specs=pl.BlockSpec((1, gb, BN), lambda s: (s, 0, 0)),
        compiler_params=pltpu.CompilerParams(
            dimension_semantics=("parallel",)),               # shard steps over TCs
        cost_estimate=pl.CostEstimate(flops=flops,
                                      transcendentals=transcendentals,
                                      bytes_accessed=bytes_accessed),
    )(a_blk, x_flat,
      params["w1"], params["b1"],
      params["w2"], params["b2"],
      params["w3"], params["b3"],
      params["att_w"],
      params["fc_w"], params["fc_b"])
    return out.reshape(g_pad, BN)[:G]


# ---------------------------- pure-JAX reference ------------------------------
def gcn_model_reference(x, a_hat, params):
    def one(xg, ag):
        h = jnp.maximum(ag @ (xg @ params["w1"]) + params["b1"], 0.0)
        h = jnp.maximum(ag @ (h @ params["w2"]) + params["b2"], 0.0)
        h = jnp.maximum(ag @ (h @ params["w3"]) + params["b3"], 0.0)
        ctx = jnp.mean(h @ params["att_w"], axis=0)
        tg = jnp.tanh(ctx)
        scores = jax.nn.sigmoid(h @ tg[:, None])          # (N, 1)
        rep = (h.T @ scores).T                            # (1, F3)
        return jnp.maximum(rep @ params["fc_w"] + params["fc_b"], 0.0)[0]
    return jax.vmap(one)(x, a_hat)


# --------------------------- parameter / graph setup --------------------------
def xavier_uniform(key, shape):
    fan_in, fan_out = shape[0], shape[1]
    bound = jnp.sqrt(6.0 / (fan_in + fan_out))
    return jax.random.uniform(key, shape, jnp.float32, -bound, bound)


def make_params(key, num_node_features, f1, f2, f3, bottle_neck):
    ks = jax.random.split(key, 8)
    return {
        "w1": xavier_uniform(ks[0], (num_node_features, f1)),
        "b1": jnp.zeros((1, f1), jnp.float32),
        "w2": xavier_uniform(ks[1], (f1, f2)),
        "b2": jnp.zeros((1, f2), jnp.float32),
        "w3": xavier_uniform(ks[2], (f2, f3)),
        "b3": jnp.zeros((1, f3), jnp.float32),
        "att_w": xavier_uniform(ks[3], (f3, f3)),
        "fc_w": xavier_uniform(ks[4], (f3, bottle_neck)),
        "fc_b": 0.01 * jax.random.normal(ks[5], (1, bottle_neck), jnp.float32),
    }


def normalized_adjacency(edge_index, num_nodes):
    """Dense GCN-normalized adjacency: D^{-1/2}(A + I)D^{-1/2}."""
    src, dst = edge_index
    a = jnp.zeros((num_nodes, num_nodes), jnp.float32)
    a = a.at[dst, src].set(1.0)                      # message flows src -> dst
    a = a + jnp.eye(num_nodes, dtype=jnp.float32)    # self loops
    deg = jnp.sum(a, axis=1)
    d_inv_sqrt = jnp.where(deg > 0, 1.0 / jnp.sqrt(deg), 0.0)
    return a * d_inv_sqrt[:, None] * d_inv_sqrt[None, :]


# ----------------------------------- main -------------------------------------
if __name__ == "__main__":
    G = 32                      # graphs per call (16 graphs batched per grid step)
    N = 8                       # nodes per graph (multiple of 8 -> free in-kernel reshape)
    NUM_NODE_FEATURES = 4
    F1, F2, F3 = 32, 32, 32
    BOTTLE_NECK = 16

    key = jax.random.PRNGKey(0)
    k_x, k_p = jax.random.split(key)

    # Node features (data.x) per graph.
    x = jax.random.normal(k_x, (G, N, NUM_NODE_FEATURES), jnp.float32)

    # Deterministic ring-like graphs (data.edge_index), one per batch entry.
    a_list = []
    for g in range(G):
        src = jnp.arange(N, dtype=jnp.int32)
        dst = (src + 1 + (g % (N - 1))) % N
        edge_index = jnp.stack([jnp.concatenate([src, dst]),
                                jnp.concatenate([dst, src])], axis=0)  # undirected
        a_list.append(normalized_adjacency(edge_index, N))
    a_hat = jnp.stack(a_list, axis=0)                      # (G, N, N)

    params = make_params(k_p, NUM_NODE_FEATURES, F1, F2, F3, BOTTLE_NECK)

    out = gcn_model_forward(x, a_hat, params, graphs_per_step=16)
    out = jax.block_until_ready(out)
    assert out.shape == (G, BOTTLE_NECK)

    ref = jax.block_until_ready(gcn_model_reference(x, a_hat, params))
    assert jnp.allclose(out, ref, rtol=1e-3, atol=1e-3), (
        float(jnp.max(jnp.abs(out - ref))))

    print("KERNEL_OK")
</pallas_src>

<mosaic_0001>
module attributes {stable_mosaic.version = 11 : i64} {
  func.func @gcn_siamese_kernel(%arg0: i32, %arg1: memref<1x128x128xf32, #tpu.memory_space<vmem>>, %arg2: memref<1x128x4xf32, #tpu.memory_space<vmem>>, %arg3: memref<4x32xf32, #tpu.memory_space<vmem>>, %arg4: memref<1x32xf32, #tpu.memory_space<vmem>>, %arg5: memref<32x32xf32, #tpu.memory_space<vmem>>, %arg6: memref<1x32xf32, #tpu.memory_space<vmem>>, %arg7: memref<32x32xf32, #tpu.memory_space<vmem>>, %arg8: memref<1x32xf32, #tpu.memory_space<vmem>>, %arg9: memref<32x32xf32, #tpu.memory_space<vmem>>, %arg10: memref<32x16xf32, #tpu.memory_space<vmem>>, %arg11: memref<1x16xf32, #tpu.memory_space<vmem>>, %arg12: memref<1x16x16xf32, #tpu.memory_space<vmem>>) attributes {dimension_semantics = [#tpu.dimension_semantics<parallel>], iteration_bounds = array<i64: 2>, scalar_prefetch = 0 : i64, scratch_operands = 0 : i64, tpu.core_type = #tpu.core_type<tc>, window_params = [{transform_indices = @transform_0, window_bounds = array<i64: 1, 128, 128>}, {transform_indices = @transform_1, window_bounds = array<i64: 1, 128, 4>}, {pipeline_mode = #tpu.pipeline_mode<synchronous>, transform_indices = @transform_2, window_bounds = array<i64: 4, 32>}, {pipeline_mode = #tpu.pipeline_mode<synchronous>, transform_indices = @transform_3, window_bounds = array<i64: 1, 32>}, {pipeline_mode = #tpu.pipeline_mode<synchronous>, transform_indices = @transform_4, window_bounds = array<i64: 32, 32>}, {pipeline_mode = #tpu.pipeline_mode<synchronous>, transform_indices = @transform_5, window_bounds = array<i64: 1, 32>}, {pipeline_mode = #tpu.pipeline_mode<synchronous>, transform_indices = @transform_6, window_bounds = array<i64: 32, 32>}, {pipeline_mode = #tpu.pipeline_mode<synchronous>, transform_indices = @transform_7, window_bounds = array<i64: 1, 32>}, {pipeline_mode = #tpu.pipeline_mode<synchronous>, transform_indices = @transform_8, window_bounds = array<i64: 32, 32>}, {pipeline_mode = #tpu.pipeline_mode<synchronous>, transform_indices = @transform_9, window_bounds = array<i64: 32, 16>}, {pipeline_mode = #tpu.pipeline_mode<synchronous>, transform_indices = @transform_10, window_bounds = array<i64: 1, 16>}, {transform_indices = @transform_11, window_bounds = array<i64: 1, 16, 16>}]} {
    %c0 = arith.constant 0 : index
    %c0_0 = arith.constant 0 : index
    %c0_1 = arith.constant 0 : index
    %0 = vector.load %arg1[%c0, %c0_0, %c0_1] : memref<1x128x128xf32, #tpu.memory_space<vmem>>, vector<1x128x128xf32>
    %1 = vector.shape_cast %0 : vector<1x128x128xf32> to vector<128x128xf32>
    %c0_2 = arith.constant 0 : index
    %c0_3 = arith.constant 0 : index
    %c0_4 = arith.constant 0 : index
    %2 = vector.load %arg2[%c0_2, %c0_3, %c0_4] : memref<1x128x4xf32, #tpu.memory_space<vmem>>, vector<1x128x4xf32>
    %3 = vector.shape_cast %2 : vector<1x128x4xf32> to vector<128x4xf32>
    %cst = arith.constant dense<0.000000e+00> : vector<128x4xf32>
    %4 = tpu.matmul %1, %3, %cst {dimension_numbers = #tpu.dot_dimension_numbers<[1], [0], [0], [1], [0, 0, 1, 1], [], []>} : vector<128x128xf32>, vector<128x4xf32>, vector<128x4xf32> -> vector<128x4xf32>
    %c0_5 = arith.constant 0 : index
    %c0_6 = arith.constant 0 : index
    %5 = vector.load %arg3[%c0_5, %c0_6] : memref<4x32xf32, #tpu.memory_space<vmem>>, vector<4x32xf32>
    %cst_7 = arith.constant dense<0.000000e+00> : vector<128x32xf32>
    %6 = tpu.matmul %4, %5, %cst_7 {dimension_numbers = #tpu.dot_dimension_numbers<[1], [0], [0], [1], [0, 0, 1, 1], [], []>} : vector<128x4xf32>, vector<4x32xf32>, vector<128x32xf32> -> vector<128x32xf32>
    %c0_8 = arith.constant 0 : index
    %c0_9 = arith.constant 0 : index
    %7 = vector.load %arg4[%c0_8, %c0_9] : memref<1x32xf32, #tpu.memory_space<vmem>>, vector<1x32xf32>
    %8 = vector.broadcast %7 : vector<1x32xf32> to vector<128x32xf32>
    %9 = arith.addf %6, %8 : vector<128x32xf32>
    %cst_10 = arith.constant 0.000000e+00 : f32
    %10 = vector.broadcast %cst_10 : f32 to vector<128x32xf32>
    %11 = arith.maximumf %9, %10 : vector<128x32xf32>
    %c0_11 = arith.constant 0 : index
    %c0_12 = arith.constant 0 : index
    %12 = vector.load %arg5[%c0_11, %c0_12] : memref<32x32xf32, #tpu.memory_space<vmem>>, vector<32x32xf32>
    %cst_13 = arith.constant dense<0.000000e+00> : vector<128x32xf32>
    %13 = tpu.matmul %11, %12, %cst_13 {dimension_numbers = #tpu.dot_dimension_numbers<[1], [0], [0], [1], [0, 0, 1, 1], [], []>} : vector<128x32xf32>, vector<32x32xf32>, vector<128x32xf32> -> vector<128x32xf32>
    %cst_14 = arith.constant dense<0.000000e+00> : vector<128x32xf32>
    %14 = tpu.matmul %1, %13, %cst_14 {dimension_numbers = #tpu.dot_dimension_numbers<[1], [0], [0], [1], [0, 0, 1, 1], [], []>} : vector<128x128xf32>, vector<128x32xf32>, vector<128x32xf32> -> vector<128x32xf32>
    %c0_15 = arith.constant 0 : index
    %c0_16 = arith.constant 0 : index
    %15 = vector.load %arg6[%c0_15, %c0_16] : memref<1x32xf32, #tpu.memory_space<vmem>>, vector<1x32xf32>
    %16 = vector.broadcast %15 : vector<1x32xf32> to vector<128x32xf32>
    %17 = arith.addf %14, %16 : vector<128x32xf32>
    %cst_17 = arith.constant 0.000000e+00 : f32
    %18 = vector.broadcast %cst_17 : f32 to vector<128x32xf32>
    %19 = arith.maximumf %17, %18 : vector<128x32xf32>
    %c0_18 = arith.constant 0 : index
    %c0_19 = arith.constant 0 : index
    %20 = vector.load %arg7[%c0_18, %c0_19] : memref<32x32xf32, #tpu.memory_space<vmem>>, vector<32x32xf32>
    %cst_20 = arith.constant dense<0.000000e+00> : vector<128x32xf32>
    %21 = tpu.matmul %19, %20, %cst_20 {dimension_numbers = #tpu.dot_dimension_numbers<[1], [0], [0], [1], [0, 0, 1, 1], [], []>} : vector<128x32xf32>, vector<32x32xf32>, vector<128x32xf32> -> vector<128x32xf32>
    %cst_21 = arith.constant dense<0.000000e+00> : vector<128x32xf32>
    %22 = tpu.matmul %1, %21, %cst_21 {dimension_numbers = #tpu.dot_dimension_numbers<[1], [0], [0], [1], [0, 0, 1, 1], [], []>} : vector<128x128xf32>, vector<128x32xf32>, vector<128x32xf32> -> vector<128x32xf32>
    %c0_22 = arith.constant 0 : index
    %c0_23 = arith.constant 0 : index
    %23 = vector.load %arg8[%c0_22, %c0_23] : memref<1x32xf32, #tpu.memory_space<vmem>>, vector<1x32xf32>
    %24 = vector.broadcast %23 : vector<1x32xf32> to vector<128x32xf32>
    %25 = arith.addf %22, %24 : vector<128x32xf32>
    %cst_24 = arith.constant 0.000000e+00 : f32
    %26 = vector.broadcast %cst_24 : f32 to vector<128x32xf32>
    %27 = arith.maximumf %25, %26 : vector<128x32xf32>
    %c0_25 = arith.constant 0 : index
    %c0_26 = arith.constant 0 : index
    %28 = vector.load %arg9[%c0_25, %c0_26] : memref<32x32xf32, #tpu.memory_space<vmem>>, vector<32x32xf32>
    %cst_27 = arith.constant dense<0.000000e+00> : vector<128x32xf32>
    %29 = tpu.matmul %27, %28, %cst_27 {dimension_numbers = #tpu.dot_dimension_numbers<[1], [0], [0], [1], [0, 0, 1, 1], [], []>} : vector<128x32xf32>, vector<32x32xf32>, vector<128x32xf32> -> vector<128x32xf32>
    %30 = vector.shape_cast %27 : vector<128x32xf32> to vector<16x8x32xf32>
    %31 = vector.shape_cast %29 : vector<128x32xf32> to vector<16x8x32xf32>
    %cst_28 = arith.constant dense<0.000000e+00> : vector<16x32xf32>
    %32 = vector.multi_reduction <add>, %31, %cst_28 [1] : vector<16x8x32xf32> to vector<16x32xf32>
    %33 = vector.shape_cast %32 : vector<16x32xf32> to vector<16x1x32xf32>
    %cst_29 = arith.constant 8.000000e+00 : f32
    %34 = vector.broadcast %cst_29 : f32 to vector<16x1x32xf32>
    %35 = arith.divf %33, %34 : vector<16x1x32xf32>
    %36 = math.tanh %35 : vector<16x1x32xf32>
    %37 = vector.broadcast %36 : vector<16x1x32xf32> to vector<16x8x32xf32>
    %38 = arith.mulf %30, %37 : vector<16x8x32xf32>
    %cst_30 = arith.constant dense<0.000000e+00> : vector<16x8xf32>
    %39 = vector.multi_reduction <add>, %38, %cst_30 [2] : vector<16x8x32xf32> to vector<16x8xf32>
    %40 = vector.shape_cast %39 : vector<16x8xf32> to vector<16x8x1xf32>
    %41 = arith.negf %40 : vector<16x8x1xf32>
    %42 = math.exp %41 : vector<16x8x1xf32>
    %cst_31 = arith.constant 1.000000e+00 : f32
    %43 = vector.broadcast %cst_31 : f32 to vector<16x8x1xf32>
    %44 = arith.addf %43, %42 : vector<16x8x1xf32>
    %45 = arith.divf %43, %44 : vector<16x8x1xf32>
    %46 = vector.broadcast %45 : vector<16x8x1xf32> to vector<16x8x32xf32>
    %47 = arith.mulf %46, %30 : vector<16x8x32xf32>
    %cst_32 = arith.constant dense<0.000000e+00> : vector<16x32xf32>
    %48 = vector.multi_reduction <add>, %47, %cst_32 [1] : vector<16x8x32xf32> to vector<16x32xf32>
    %c0_33 = arith.constant 0 : index
    %c0_34 = arith.constant 0 : index
    %49 = vector.load %arg10[%c0_33, %c0_34] : memref<32x16xf32, #tpu.memory_space<vmem>>, vector<32x16xf32>
    %cst_35 = arith.constant dense<0.000000e+00> : vector<16x16xf32>
    %50 = tpu.matmul %48, %49, %cst_35 {dimension_numbers = #tpu.dot_dimension_numbers<[1], [0], [0], [1], [0, 0, 1, 1], [], []>} : vector<16x32xf32>, vector<32x16xf32>, vector<16x16xf32> -> vector<16x16xf32>
    %c0_36 = arith.constant 0 : index
    %c0_37 = arith.constant 0 : index
    %51 = vector.load %arg11[%c0_36, %c0_37] : memref<1x16xf32, #tpu.memory_space<vmem>>, vector<1x16xf32>
    %52 = vector.broadcast %51 : vector<1x16xf32> to vector<16x16xf32>
    %53 = arith.addf %50, %52 : vector<16x16xf32>
    %cst_38 = arith.constant 0.000000e+00 : f32
    %54 = vector.broadcast %cst_38 : f32 to vector<16x16xf32>
    %55 = arith.maximumf %53, %54 : vector<16x16xf32>
    %c0_39 = arith.constant 0 : index
    %c0_40 = arith.constant 0 : index
    %c0_41 = arith.constant 0 : index
    %56 = vector.load %arg12[%c0_39, %c0_40, %c0_41] : memref<1x16x16xf32, #tpu.memory_space<vmem>>, vector<1x16x16xf32>
    %57 = vector.shape_cast %56 : vector<1x16x16xf32> to vector<16x16xf32>
    %58 = vector.shape_cast %55 : vector<16x16xf32> to vector<1x16x16xf32>
    tpu.vector_store %arg12[%c0_39, %c0_40, %c0_41], %58 {strides = array<i32>} : memref<1x16x16xf32, #tpu.memory_space<vmem>>, vector<1x16x16xf32>,
    return
  }
  func.func @transform_0(%arg0: i32) -> (i32, i32, i32) {
    %c0_i32 = arith.constant 0 : i32
    %c0_i32_0 = arith.constant 0 : i32
    %c0_i32_1 = arith.constant 0 : i32
    return %arg0, %c0_i32, %c0_i32_0 : i32, i32, i32
  }
  func.func @transform_1(%arg0: i32) -> (i32, i32, i32) {
    %c0_i32 = arith.constant 0 : i32
    %c0_i32_0 = arith.constant 0 : i32
    %c0_i32_1 = arith.constant 0 : i32
    return %arg0, %c0_i32, %c0_i32_0 : i32, i32, i32
  }
  func.func @transform_2(%arg0: i32) -> (i32, i32) {
    %c0_i32 = arith.constant 0 : i32
    %c0_i32_0 = arith.constant 0 : i32
    %c0_i32_1 = arith.constant 0 : i32
    return %c0_i32, %c0_i32_0 : i32, i32
  }
  func.func @transform_3(%arg0: i32) -> (i32, i32) {
    %c0_i32 = arith.constant 0 : i32
    %c0_i32_0 = arith.constant 0 : i32
    %c0_i32_1 = arith.constant 0 : i32
    return %c0_i32, %c0_i32_0 : i32, i32
  }
  func.func @transform_4(%arg0: i32) -> (i32, i32) {
    %c0_i32 = arith.constant 0 : i32
    %c0_i32_0 = arith.constant 0 : i32
    %c0_i32_1 = arith.constant 0 : i32
    return %c0_i32, %c0_i32_0 : i32, i32
  }
  func.func @transform_5(%arg0: i32) -> (i32, i32) {
    %c0_i32 = arith.constant 0 : i32
    %c0_i32_0 = arith.constant 0 : i32
    %c0_i32_1 = arith.constant 0 : i32
    return %c0_i32, %c0_i32_0 : i32, i32
  }
  func.func @transform_6(%arg0: i32) -> (i32, i32) {
    %c0_i32 = arith.constant 0 : i32
    %c0_i32_0 = arith.constant 0 : i32
    %c0_i32_1 = arith.constant 0 : i32
    return %c0_i32, %c0_i32_0 : i32, i32
  }
  func.func @transform_7(%arg0: i32) -> (i32, i32) {
    %c0_i32 = arith.constant 0 : i32
    %c0_i32_0 = arith.constant 0 : i32
    %c0_i32_1 = arith.constant 0 : i32
    return %c0_i32, %c0_i32_0 : i32, i32
  }
  func.func @transform_8(%arg0: i32) -> (i32, i32) {
    %c0_i32 = arith.constant 0 : i32
    %c0_i32_0 = arith.constant 0 : i32
    %c0_i32_1 = arith.constant 0 : i32
    return %c0_i32, %c0_i32_0 : i32, i32
  }
  func.func @transform_9(%arg0: i32) -> (i32, i32) {
    %c0_i32 = arith.constant 0 : i32
    %c0_i32_0 = arith.constant 0 : i32
    %c0_i32_1 = arith.constant 0 : i32
    return %c0_i32, %c0_i32_0 : i32, i32
  }
  func.func @transform_10(%arg0: i32) -> (i32, i32) {
    %c0_i32 = arith.constant 0 : i32
    %c0_i32_0 = arith.constant 0 : i32
    %c0_i32_1 = arith.constant 0 : i32
    return %c0_i32, %c0_i32_0 : i32, i32
  }
  func.func @transform_11(%arg0: i32) -> (i32, i32, i32) {
    %c0_i32 = arith.constant 0 : i32
    %c0_i32_0 = arith.constant 0 : i32
    %c0_i32_1 = arith.constant 0 : i32
    return %arg0, %c0_i32, %c0_i32_0 : i32, i32, i32
  }
}

</mosaic_0001>

<llo_original>
// kernel: tpu_custom_call.1
$region0: #{tpu_custom_call.1}
  #allocation0 [shape = 'u32[]', space=smem, size = 0x4, offset = 0x4, fixed_abs, tag = 'smem constant byte address 0x4 - core index']
  #allocation1 [shape = 'u32[144,128]{1,0:T(1,128)}', space=vmem, size = 0x12000, scoped, tag = 'internal scratch']
  %s0 = inlined_call_operand.vmem [shape: f32[2,128,128], index: 0, kind: input, shape index: {}]
  %s1 = inlined_call_operand.vmem [shape: f32[2,128,4], index: 1, kind: input, shape index: {}]
  %s2 = inlined_call_operand.hbm [shape: f32[4,32], index: 2, kind: input, shape index: {}]
  %s3 = inlined_call_operand.vmem [shape: f32[1,32], index: 3, kind: input, shape index: {}]
  %s4 = inlined_call_operand.vmem [shape: f32[32,32], index: 4, kind: input, shape index: {}]
  %s5 = inlined_call_operand.vmem [shape: f32[1,32], index: 5, kind: input, shape index: {}]
  %s6 = inlined_call_operand.vmem [shape: f32[32,32], index: 6, kind: input, shape index: {}]
  %s7 = inlined_call_operand.vmem [shape: f32[1,32], index: 7, kind: input, shape index: {}]
  %s8 = inlined_call_operand.hbm [shape: f32[32,32], index: 8, kind: input, shape index: {}]
  %s9 = inlined_call_operand.vmem [shape: f32[32,16], index: 9, kind: input, shape index: {}]
  %s10 = inlined_call_operand.vmem [shape: f32[1,16], index: 10, kind: input, shape index: {}]
  %s11 = inlined_call_operand.hbm [shape: f32[2,16,16], index: 11, kind: output, shape index: {}]
  %s12 = sld [smem:[#allocation0]]
  $region85: #{tpu_custom_call.1} parent=0
    _
  %s14 = ssub.s32 1, %s12
  %s15 = scalar_select 0, %s14, %s12
  $region1: #{tpu_custom_call.1} parent=0
    #allocation2 [shape = 'u8[2048]{0}', space=vmem, size = 0x800, scoped, tag = 'input window, operand 2, single buffered']
    #allocation3 [shape = 's32[2]{0}', space=sflag, size = 0x8, scoped, tag = 'scoped memory for tpu_custom_call.1']
    #allocation4 [shape = 's32[2]{0}', space=sflag, size = 0x8, scoped, tag = 'scoped memory for tpu_custom_call.1']
    #allocation5 [shape = 'u8[16384]{0}', space=vmem, size = 0x4000, scoped, tag = 'input window, operand 8, single buffered']
    #allocation6 [shape = 's32[1]{0}', space=sflag, size = 0x4, scoped, tag = 'scoped memory for tpu_custom_call.1']
    #allocation7 [shape = 'u8[16384]{0}', space=vmem, size = 0x4000, scoped, tag = 'output window, operand 0']
    %16 = vsyncpa [#allocation3], 0
    %17 = vsyncpa [#allocation6], 0
    %18 = vsyncpa [#allocation4], 0
    %s19 = scalar_lea.sflag [#allocation4], 1
    %20 = vsyncpa %s19, 0
    loop: start=0, step=1, limit=4
    $region2: #{tpu_custom_call.1} parent=1 // loop_pre_header
      _
    $region3: #{tpu_custom_call.1} parent=1 // loop_header
      %s22 = sphi 0, %s26
      %p23 = scmp.ge.s32.totalorder %s22, 4
      %s32 = sphi 0, %s34
      %s35 = sphi 0, %s32
      %s36 = sphi 0, %s35
      %s52 = sphi 0, %s36
      %s58 = sphi 0, %s60
      %s61 = sphi 0, %s58
      %s62 = sphi 0, %s61
      %s78 = sphi 0, %s62
      %s82 = sphi 0, %s82
      %s84 = sphi 0, %s82
      %s85 = sphi 0, %s84
      %s99 = sphi 0, %s85
      %s103 = sphi 0, %s103
      %s105 = sphi 0, %s103
      %s106 = sphi 0, %s105
      %s120 = sphi 0, %s106
      %s124 = sphi 0, %s124
      %s126 = sphi 0, %s124
      %s127 = sphi 0, %s126
      %s141 = sphi 0, %s127
      %s145 = sphi 0, %s145
      %s147 = sphi 0, %s145
      %s148 = sphi 0, %s147
      %s162 = sphi 0, %s148
      %s166 = sphi 0, %s166
      %s168 = sphi 0, %s166
      %s169 = sphi 0, %s168
      %s183 = sphi 0, %s169
      %s187 = sphi 0, %s187
      %s189 = sphi 0, %s187
      %s190 = sphi 0, %s189
      %s204 = sphi 0, %s190
      %s208 = sphi 0, %s208
      %s210 = sphi 0, %s208
      %s211 = sphi 0, %s210
      %s225 = sphi 0, %s211
      %s229 = sphi 0, %s229
      %s231 = sphi 0, %s229
      %s232 = sphi 0, %s231
      %s246 = sphi 0, %s232
      %s250 = sphi 0, %s250
      %s252 = sphi 0, %s250
      %s253 = sphi 0, %s252
      %s267 = sphi 0, %s253
      %s273 = sphi 0, %s275
      %s276 = sphi 0, %s273
      %s277 = sphi 0, %s276
      %s293 = sphi 0, %s277
    $region4: #{tpu_custom_call.1} parent=1 // loop_header_branch
      %25 = sbr.rel (%p23) target = $region8
    $region5: #{tpu_custom_call.1} parent=1 // loop_body
      %s27 = ssub.s32 %s22, 1
      %s28 = ssub.s32 %s22, 2
      %s29 = sadd.s32 %s22, 1
      %s30 = ssub.s32 %s22, %s29
      %p31 = scmp.eq.s32.totalorder %s30, 0
      %s33 = sadd.s32 %s32, 1
      %s34 = scalar_select %p31, %s32, %s33
      %p37 = pneg %p31
      %p38 = scmp.eq.s32.totalorder %s22, 1
      %p39 = por %p37, %p38
      %p40 = scmp.ne.s32.totalorder %s32, %s35
      %p41 = scmp.eq.s32.totalorder %s22, 0
      %p42 = por %p40, %p41
      %p43 = scmp.ne.s32.totalorder %s32, %s35
      %p44 = scmp.eq.s32.totalorder %s27, 1
      %p45 = por %p43, %p44
      %p46 = scmp.ne.s32.totalorder %s35, %s36
      %p47 = scmp.eq.s32.totalorder %s27, 0
      %p48 = por %p46, %p47
      %p49 = scmp.ne.s32.totalorder %s35, %s36
      %p50 = scmp.eq.s32.totalorder %s28, 1
      %p51 = por %p49, %p50
      %p53 = scmp.ne.s32.totalorder %s36, %s52
      %p54 = scmp.eq.s32.totalorder %s28, 0
      %p55 = por %p53, %p54
      %s56 = ssub.s32 %s22, %s29
      %p57 = scmp.eq.s32.totalorder %s56, 0
      %s59 = sadd.s32 %s58, 1
      %s60 = scalar_select %p57, %s58, %s59
      %p63 = pneg %p57
      %p64 = scmp.eq.s32.totalorder %s22, 1
      %p65 = por %p63, %p64
      %p66 = scmp.ne.s32.totalorder %s58, %s61
      %p67 = scmp.eq.s32.totalorder %s22, 0
      %p68 = por %p66, %p67
      %p69 = scmp.ne.s32.totalorder %s58, %s61
      %p70 = scmp.eq.s32.totalorder %s27, 1
      %p71 = por %p69, %p70
      %p72 = scmp.ne.s32.totalorder %s61, %s62
      %p73 = scmp.eq.s32.totalorder %s27, 0
      %p74 = por %p72, %p73
      %p75 = scmp.ne.s32.totalorder %s61, %s62
      %p76 = scmp.eq.s32.totalorder %s28, 1
      %p77 = por %p75, %p76
      %p79 = scmp.ne.s32.totalorder %s62, %s78
      %p80 = scmp.eq.s32.totalorder %s28, 0
      %p81 = por %p79, %p80
      %s83 = sadd.s32 %s82, 1
      %p86 = scmp.eq.s32.totalorder %s22, 1
      %p87 = scmp.ne.s32.totalorder %s82, %s84
      %p88 = scmp.eq.s32.totalorder %s22, 0
      %p89 = por %p87, %p88
      %p90 = scmp.ne.s32.totalorder %s82, %s84
      %p91 = scmp.eq.s32.totalorder %s27, 1
      %p92 = por %p90, %p91
      %p93 = scmp.ne.s32.totalorder %s84, %s85
      %p94 = scmp.eq.s32.totalorder %s27, 0
      %p95 = por %p93, %p94
      %p96 = scmp.ne.s32.totalorder %s84, %s85
      %p97 = scmp.eq.s32.totalorder %s28, 1
      %p98 = por %p96, %p97
      %p100 = scmp.ne.s32.totalorder %s85, %s99
      %p101 = scmp.eq.s32.totalorder %s28, 0
      %p102 = por %p100, %p101
      %s104 = sadd.s32 %s103, 1
      %p107 = scmp.eq.s32.totalorder %s22, 1
      %p108 = scmp.ne.s32.totalorder %s103, %s105
      %p109 = scmp.eq.s32.totalorder %s22, 0
      %p110 = por %p108, %p109
      %p111 = scmp.ne.s32.totalorder %s103, %s105
      %p112 = scmp.eq.s32.totalorder %s27, 1
      %p113 = por %p111, %p112
      %p114 = scmp.ne.s32.totalorder %s105, %s106
      %p115 = scmp.eq.s32.totalorder %s27, 0
      %p116 = por %p114, %p115
      %p117 = scmp.ne.s32.totalorder %s105, %s106
      %p118 = scmp.eq.s32.totalorder %s28, 1
      %p119 = por %p117, %p118
      %p121 = scmp.ne.s32.totalorder %s106, %s120
      %p122 = scmp.eq.s32.totalorder %s28, 0
      %p123 = por %p121, %p122
      %s125 = sadd.s32 %s124, 1
      %p128 = scmp.eq.s32.totalorder %s22, 1
      %p129 = scmp.ne.s32.totalorder %s124, %s126
      %p130 = scmp.eq.s32.totalorder %s22, 0
      %p131 = por %p129, %p130
      %p132 = scmp.ne.s32.totalorder %s124, %s126
      %p133 = scmp.eq.s32.totalorder %s27, 1
      %p134 = por %p132, %p133
      %p135 = scmp.ne.s32.totalorder %s126, %s127
      %p136 = scmp.eq.s32.totalorder %s27, 0
      %p137 = por %p135, %p136
      %p138 = scmp.ne.s32.totalorder %s126, %s127
      %p139 = scmp.eq.s32.totalorder %s28, 1
      %p140 = por %p138, %p139
      %p142 = scmp.ne.s32.totalorder %s127, %s141
      %p143 = scmp.eq.s32.totalorder %s28, 0
      %p144 = por %p142, %p143
      %s146 = sadd.s32 %s145, 1
      %p149 = scmp.eq.s32.totalorder %s22, 1
      %p150 = scmp.ne.s32.totalorder %s145, %s147
      %p151 = scmp.eq.s32.totalorder %s22, 0
      %p152 = por %p150, %p151
      %p153 = scmp.ne.s32.totalorder %s145, %s147
      %p154 = scmp.eq.s32.totalorder %s27, 1
      %p155 = por %p153, %p154
      %p156 = scmp.ne.s32.totalorder %s147, %s148
      %p157 = scmp.eq.s32.totalorder %s27, 0
      %p158 = por %p156, %p157
      %p159 = scmp.ne.s32.totalorder %s147, %s148
      %p160 = scmp.eq.s32.totalorder %s28, 1
      %p161 = por %p159, %p160
      %p163 = scmp.ne.s32.totalorder %s148, %s162
      %p164 = scmp.eq.s32.totalorder %s28, 0
      %p165 = por %p163, %p164
      %s167 = sadd.s32 %s166, 1
      %p170 = scmp.eq.s32.totalorder %s22, 1
      %p171 = scmp.ne.s32.totalorder %s166, %s168
      %p172 = scmp.eq.s32.totalorder %s22, 0
      %p173 = por %p171, %p172
      %p174 = scmp.ne.s32.totalorder %s166, %s168
      %p175 = scmp.eq.s32.totalorder %s27, 1
      %p176 = por %p174, %p175
      %p177 = scmp.ne.s32.totalorder %s168, %s169
      %p178 = scmp.eq.s32.totalorder %s27, 0
      %p179 = por %p177, %p178
      %p180 = scmp.ne.s32.totalorder %s168, %s169
      %p181 = scmp.eq.s32.totalorder %s28, 1
      %p182 = por %p180, %p181
      %p184 = scmp.ne.s32.totalorder %s169, %s183
      %p185 = scmp.eq.s32.totalorder %s28, 0
      %p186 = por %p184, %p185
      %s188 = sadd.s32 %s187, 1
      %p191 = scmp.eq.s32.totalorder %s22, 1
      %p192 = scmp.ne.s32.totalorder %s187, %s189
      %p193 = scmp.eq.s32.totalorder %s22, 0
      %p194 = por %p192, %p193
      %p195 = scmp.ne.s32.totalorder %s187, %s189
      %p196 = scmp.eq.s32.totalorder %s27, 1
      %p197 = por %p195, %p196
      %p198 = scmp.ne.s32.totalorder %s189, %s190
      %p199 = scmp.eq.s32.totalorder %s27, 0
      %p200 = por %p198, %p199
      %p201 = scmp.ne.s32.totalorder %s189, %s190
      %p202 = scmp.eq.s32.totalorder %s28, 1
      %p203 = por %p201, %p202
      %p205 = scmp.ne.s32.totalorder %s190, %s204
      %p206 = scmp.eq.s32.totalorder %s28, 0
      %p207 = por %p205, %p206
      %s209 = sadd.s32 %s208, 1
      %p212 = scmp.eq.s32.totalorder %s22, 1
      %p213 = scmp.ne.s32.totalorder %s208, %s210
      %p214 = scmp.eq.s32.totalorder %s22, 0
      %p215 = por %p213, %p214
      %p216 = scmp.ne.s32.totalorder %s208, %s210
      %p217 = scmp.eq.s32.totalorder %s27, 1
      %p218 = por %p216, %p217
      %p219 = scmp.ne.s32.totalorder %s210, %s211
      %p220 = scmp.eq.s32.totalorder %s27, 0
      %p221 = por %p219, %p220
      %p222 = scmp.ne.s32.totalorder %s210, %s211
      %p223 = scmp.eq.s32.totalorder %s28, 1
      %p224 = por %p222, %p223
      %p226 = scmp.ne.s32.totalorder %s211, %s225
      %p227 = scmp.eq.s32.totalorder %s28, 0
      %p228 = por %p226, %p227
      %s230 = sadd.s32 %s229, 1
      %p233 = scmp.eq.s32.totalorder %s22, 1
      %p234 = scmp.ne.s32.totalorder %s229, %s231
      %p235 = scmp.eq.s32.totalorder %s22, 0
      %p236 = por %p234, %p235
      %p237 = scmp.ne.s32.totalorder %s229, %s231
      %p238 = scmp.eq.s32.totalorder %s27, 1
      %p239 = por %p237, %p238
      %p240 = scmp.ne.s32.totalorder %s231, %s232
      %p241 = scmp.eq.s32.totalorder %s27, 0
      %p242 = por %p240, %p241
      %p243 = scmp.ne.s32.totalorder %s231, %s232
      %p244 = scmp.eq.s32.totalorder %s28, 1
      %p245 = por %p243, %p244
      %p247 = scmp.ne.s32.totalorder %s232, %s246
      %p248 = scmp.eq.s32.totalorder %s28, 0
      %p249 = por %p247, %p248
      %s251 = sadd.s32 %s250, 1
      %p254 = scmp.eq.s32.totalorder %s22, 1
      %p255 = scmp.ne.s32.totalorder %s250, %s252
      %p256 = scmp.eq.s32.totalorder %s22, 0
      %p257 = por %p255, %p256
      %p258 = scmp.ne.s32.totalorder %s250, %s252
      %p259 = scmp.eq.s32.totalorder %s27, 1
      %p260 = por %p258, %p259
      %p261 = scmp.ne.s32.totalorder %s252, %s253
      %p262 = scmp.eq.s32.totalorder %s27, 0
      %p263 = por %p261, %p262
      %p264 = scmp.ne.s32.totalorder %s252, %s253
      %p265 = scmp.eq.s32.totalorder %s28, 1
      %p266 = por %p264, %p265
      %p268 = scmp.ne.s32.totalorder %s253, %s267
      %p269 = scmp.eq.s32.totalorder %s28, 0
      %p270 = por %p268, %p269
      %s271 = ssub.s32 %s22, %s29
      %p272 = scmp.eq.s32.totalorder %s271, 0
      %s274 = sadd.s32 %s273, 1
      %s275 = scalar_select %p272, %s273, %s274
      %p278 = pneg %p272
      %p279 = scmp.eq.s32.totalorder %s22, 1
      %p280 = por %p278, %p279
      %p281 = scmp.ne.s32.totalorder %s273, %s276
      %p282 = scmp.eq.s32.totalorder %s22, 0
      %p283 = por %p281, %p282
      %p284 = scmp.ne.s32.totalorder %s273, %s276
      %p285 = scmp.eq.s32.totalorder %s27, 1
      %p286 = por %p284, %p285
      %p287 = scmp.ne.s32.totalorder %s276, %s277
      %p288 = scmp.eq.s32.totalorder %s27, 0
      %p289 = por %p287, %p288
      %p290 = scmp.ne.s32.totalorder %s276, %s277
      %p291 = scmp.eq.s32.totalorder %s28, 1
      %p292 = por %p290, %p291
      %p294 = scmp.ne.s32.totalorder %s277, %s293
      %p295 = scmp.eq.s32.totalorder %s28, 0
      %p296 = por %p294, %p295
      %p297 = scmp.le.s32.totalorder 1, %s22
      %p298 = scmp.lt.s32.totalorder %s22, 3
      %p299 = pnand %p297, %p298
      %p300 = pneg %p299
      // Predicated region
      $region9: #{tpu_custom_call.1} parent=5 // pred_check
        _
      $region10: #{tpu_custom_call.1} parent=5 // pred_check_branch
        %302 = sbr.rel (%p299) target = $region12
      $region11: #{tpu_custom_call.1} parent=5 // pred_region
        %s303 = ssub.s32 %s22, 1
        // Predicated region
        $region13: #{tpu_custom_call.1} parent=11 // pred_check
          %p304 = pneg %p95
        $region14: #{tpu_custom_call.1} parent=11 // pred_check_branch
          %306 = sbr.rel (%p304) target = $region16
        $region15: #{tpu_custom_call.1} parent=11 // pred_region
          %s308 = ssub.s32 64, 64
          %309 = vsyncadd [#allocation3], %s308
          %s311 = sshll.u32 [#allocation2], 4
          %s312 = int_to_ptr.vmem [resolvable:$true] %s311
          %314 = dma.hbm_to_vmem [thread:$0]  %s2, 64, %s312, [#allocation3]
        $region16: #{tpu_custom_call.1} parent=11 // pred_fallthru
          _
        // Predicated region
        $region17: #{tpu_custom_call.1} parent=11 // pred_check
          %p315 = pneg %p116
        $region18: #{tpu_custom_call.1} parent=11 // pred_check_branch
          %317 = sbr.rel (%p315) target = $region20
        $region19: #{tpu_custom_call.1} parent=11 // pred_region
          _
        $region20: #{tpu_custom_call.1} parent=11 // pred_fallthru
          _
        // Predicated region
        $region21: #{tpu_custom_call.1} parent=11 // pred_check
          %p318 = pneg %p137
        $region22: #{tpu_custom_call.1} parent=11 // pred_check_branch
          %320 = sbr.rel (%p318) target = $region24
        $region23: #{tpu_custom_call.1} parent=11 // pred_region
          _
        $region24: #{tpu_custom_call.1} parent=11 // pred_fallthru
          _
        // Predicated region
        $region25: #{tpu_custom_call.1} parent=11 // pred_check
          %p321 = pneg %p158
        $region26: #{tpu_custom_call.1} parent=11 // pred_check_branch
          %323 = sbr.rel (%p321) target = $region28
        $region27: #{tpu_custom_call.1} parent=11 // pred_region
          _
        $region28: #{tpu_custom_call.1} parent=11 // pred_fallthru
          _
        // Predicated region
        $region29: #{tpu_custom_call.1} parent=11 // pred_check
          %p324 = pneg %p179
        $region30: #{tpu_custom_call.1} parent=11 // pred_check_branch
          %326 = sbr.rel (%p324) target = $region32
        $region31: #{tpu_custom_call.1} parent=11 // pred_region
          _
        $region32: #{tpu_custom_call.1} parent=11 // pred_fallthru
          _
        // Predicated region
        $region33: #{tpu_custom_call.1} parent=11 // pred_check
          %p327 = pneg %p200
        $region34: #{tpu_custom_call.1} parent=11 // pred_check_branch
          %329 = sbr.rel (%p327) target = $region36
        $region35: #{tpu_custom_call.1} parent=11 // pred_region
          _
        $region36: #{tpu_custom_call.1} parent=11 // pred_fallthru
          _
        // Predicated region
        $region37: #{tpu_custom_call.1} parent=11 // pred_check
          %p330 = pneg %p221
        $region38: #{tpu_custom_call.1} parent=11 // pred_check_branch
          %332 = sbr.rel (%p330) target = $region40
        $region39: #{tpu_custom_call.1} parent=11 // pred_region
          %s334 = ssub.s32 512, 512
          %335 = vsyncadd [#allocation6], %s334
          %s336 = sshll.u32 [#allocation5], 4
          %s337 = int_to_ptr.vmem [resolvable:$true] %s336
          %342 = dma.hbm_to_vmem [thread:$0]  %s8, 512, %s337, [#allocation6], 128, 128, 8
        $region40: #{tpu_custom_call.1} parent=11 // pred_fallthru
          _
        // Predicated region
        $region41: #{tpu_custom_call.1} parent=11 // pred_check
          %p343 = pneg %p242
        $region42: #{tpu_custom_call.1} parent=11 // pred_check_branch
          %345 = sbr.rel (%p343) target = $region44
        $region43: #{tpu_custom_call.1} parent=11 // pred_region
          _
        $region44: #{tpu_custom_call.1} parent=11 // pred_fallthru
          _
        // Predicated region
        $region45: #{tpu_custom_call.1} parent=11 // pred_check
          %p346 = pneg %p263
        $region46: #{tpu_custom_call.1} parent=11 // pred_check_branch
          %348 = sbr.rel (%p346) target = $region48
        $region47: #{tpu_custom_call.1} parent=11 // pred_region
          _
        $region48: #{tpu_custom_call.1} parent=11 // pred_fallthru
          _
      $region12: #{tpu_custom_call.1} parent=5 // pred_fallthru
        _
      %p349 = scmp.lt.s32.totalorder %s22, 2
      // Predicated region
      $region49: #{tpu_custom_call.1} parent=5 // pred_check
        %p350 = pneg %p349
      $region50: #{tpu_custom_call.1} parent=5 // pred_check_branch
        %352 = sbr.rel (%p350) target = $region52
      $region51: #{tpu_custom_call.1} parent=5 // pred_region
        // Predicated region
        $region53: #{tpu_custom_call.1} parent=51 // pred_check
          %p353 = pneg %p42
        $region54: #{tpu_custom_call.1} parent=51 // pred_check_branch
          %355 = sbr.rel (%p353) target = $region56
        $region55: #{tpu_custom_call.1} parent=51 // pred_region
          %p356 = scmp.lt.s32.totalorder %s22, 1
          %s357 = scalar_select %p356, %s22, 1
          %s358 = smul.addr %s357, 16
          %s359 = smul.addr %s358, 8
          %s360 = scalar_lea.vmem %s0, %s359
        $region56: #{tpu_custom_call.1} parent=51 // pred_fallthru
          _
        // Predicated region
        $region57: #{tpu_custom_call.1} parent=51 // pred_check
          %p361 = pneg %p68
        $region58: #{tpu_custom_call.1} parent=51 // pred_check_branch
          %363 = sbr.rel (%p361) target = $region60
        $region59: #{tpu_custom_call.1} parent=51 // pred_region
          %p364 = scmp.lt.s32.totalorder %s22, 1
          %s365 = scalar_select %p364, %s22, 1
          %s366 = smul.addr %s365, 16
          %s367 = smul.addr %s366, 8
          %s368 = scalar_lea.vmem %s1, %s367
        $region60: #{tpu_custom_call.1} parent=51 // pred_fallthru
          _
      $region52: #{tpu_custom_call.1} parent=5 // pred_fallthru
        _
      %p369 = scmp.le.s32.totalorder 1, %s22
      %p370 = scmp.lt.s32.totalorder %s22, 3
      %p371 = pnand %p369, %p370
      %p372 = pneg %p371
      // Predicated region
      $region61: #{tpu_custom_call.1} parent=5 // pred_check
        _
      $region62: #{tpu_custom_call.1} parent=5 // pred_check_branch
        %374 = sbr.rel (%p371) target = $region64
      $region63: #{tpu_custom_call.1} parent=5 // pred_region
        %s375 = ssub.s32 %s22, 1
        // Predicated region
        $region65: #{tpu_custom_call.1} parent=63 // pred_check
          %p376 = pneg %p95
        $region66: #{tpu_custom_call.1} parent=63 // pred_check_branch
          %378 = sbr.rel (%p376) target = $region68
        $region67: #{tpu_custom_call.1} parent=63 // pred_region
          %379 = dma.done [#allocation3], 64
        $region68: #{tpu_custom_call.1} parent=63 // pred_fallthru
          _
        // Predicated region
        $region69: #{tpu_custom_call.1} parent=63 // pred_check
          %p380 = pneg %p221
        $region70: #{tpu_custom_call.1} parent=63 // pred_check_branch
          %382 = sbr.rel (%p380) target = $region72
        $region71: #{tpu_custom_call.1} parent=63 // pred_region
          %383 = dma.done [#allocation6], 512
        $region72: #{tpu_custom_call.1} parent=63 // pred_fallthru
          _
        %p384 = scmp.lt.s32.totalorder %s27, 1
        %s385 = scalar_select %p384, %s27, 1
        %s386 = smul.addr %s385, 16
        %s387 = smul.addr %s386, 8
        %s388 = scalar_lea.vmem %s0, %s387
        %p389 = pneg %p48
        %p390 = pneg %p45
        %p391 = scmp.lt.s32.totalorder %s27, 1
        %s392 = scalar_select %p391, %s27, 1
        %s393 = smul.addr %s392, 16
        %s394 = smul.addr %s393, 8
        %s395 = scalar_lea.vmem %s1, %s394
        %p396 = pneg %p74
        %p397 = pneg %p71
        %p398 = pneg %p95
        %p399 = pneg %p92
        %p400 = pneg %p116
        %p401 = pneg %p113
        %p402 = pneg %p137
        %p403 = pneg %p134
        %p404 = pneg %p158
        %p405 = pneg %p155
        %p406 = pneg %p179
        %p407 = pneg %p176
        %p408 = pneg %p200
        %p409 = pneg %p197
        %p410 = pneg %p221
        %p411 = pneg %p218
        %p412 = pneg %p242
        %p413 = pneg %p239
        %p414 = pneg %p263
        %p415 = pneg %p260
        %p416 = pneg %p289
        %p417 = pneg %p286
        %s418 = sand.u32 %s276, 1
        %s419 = scalar_lea.sflag [#allocation4], %s418
        %s420 = sand.u32 %s276, 1
        %s421 = smul.addr %s420, 16
        %s422 = scalar_lea.vmem [#allocation7], %s421
        %p423 = scmp.lt.s32.totalorder %s27, 1
        %s424 = scalar_select %p423, %s27, 1
        %s425 = smul.addr %s424, 16
        %s426 = smul.addr %s425, 8
        %s427 = scalar_lea.vmem %s0, %s426
        %p428 = scmp.lt.s32.totalorder %s27, 1
        %s429 = scalar_select %p428, %s27, 1
        %s430 = smul.addr %s429, 16
        %s431 = smul.addr %s430, 8
        %s432 = scalar_lea.vmem %s1, %s431
        %v433 = vld [vmem:[%s427] sm:$0xff]
        %v434 = vld [vmem:[%s427 + $0x8] sm:$0xff]
        %v435 = vld [vmem:[%s427 + $0x10] sm:$0xff]
        %v436 = vld [vmem:[%s427 + $0x18] sm:$0xff]
        %v437 = vld [vmem:[%s427 + $0x20] sm:$0xff]
        %v438 = vld [vmem:[%s427 + $0x28] sm:$0xff]
        %v439 = vld [vmem:[%s427 + $0x30] sm:$0xff]
        %v440 = vld [vmem:[%s427 + $0x38] sm:$0xff]
        %v441 = vld [vmem:[%s427 + $0x40] sm:$0xff]
        %v442 = vld [vmem:[%s427 + $0x48] sm:$0xff]
        %v443 = vld [vmem:[%s427 + $0x50] sm:$0xff]
        %v444 = vld [vmem:[%s427 + $0x58] sm:$0xff]
        %v445 = vld [vmem:[%s427 + $0x60] sm:$0xff]
        %v446 = vld [vmem:[%s427 + $0x68] sm:$0xff]
        %v447 = vld [vmem:[%s427 + $0x70] sm:$0xff]
        %v448 = vld [vmem:[%s427 + $0x78] sm:$0xff]
        %v449 = vld [vmem:[%s432] sm:$0xff]
        %v450 = vld [vmem:[%s432 + $0x8] sm:$0xff]
        %v451 = vld [vmem:[%s432 + $0x10] sm:$0xff]
        %v452 = vld [vmem:[%s432 + $0x18] sm:$0xff]
        %v453 = vld [vmem:[%s432 + $0x20] sm:$0xff]
        %v454 = vld [vmem:[%s432 + $0x28] sm:$0xff]
        %v455 = vld [vmem:[%s432 + $0x30] sm:$0xff]
        %v456 = vld [vmem:[%s432 + $0x38] sm:$0xff]
        %v457 = vld [vmem:[%s432 + $0x40] sm:$0xff]
        %v458 = vld [vmem:[%s432 + $0x48] sm:$0xff]
        %v459 = vld [vmem:[%s432 + $0x50] sm:$0xff]
        %v460 = vld [vmem:[%s432 + $0x58] sm:$0xff]
        %v461 = vld [vmem:[%s432 + $0x60] sm:$0xff]
        %v462 = vld [vmem:[%s432 + $0x68] sm:$0xff]
        %v463 = vld [vmem:[%s432 + $0x70] sm:$0xff]
        %v464 = vld [vmem:[%s432 + $0x78] sm:$0xff]
        %465 = vmatprep.subr.mxu0 0.0
        %466 = vmatpush1.msra.mxu0 %v449
        %467 = vmatprep.subr.mxu0 0.0
        %468 = vmatpush1.msra.mxu0 %v450
        %469 = vmatprep.subr.mxu0 0.0
        %470 = vmatpush1.msra.mxu0 %v451
        %471 = vmatprep.subr.mxu0 0.0
        %472 = vmatpush1.msra.mxu0 %v452
        %473 = vmatprep.subr.mxu0 0.0
        %474 = vmatpush1.msra.mxu0 %v453
        %475 = vmatprep.subr.mxu0 0.0
        %476 = vmatpush1.msra.mxu0 %v454
        %477 = vmatprep.subr.mxu0 0.0
        %478 = vmatpush1.msra.mxu0 %v455
        %479 = vmatprep.subr.mxu0 0.0
        %480 = vmatpush1.msra.mxu0 %v456
        %481 = vmatprep.subr.mxu0 0.0
        %482 = vmatpush1.msra.mxu0 %v457
        %483 = vmatprep.subr.mxu0 0.0
        %484 = vmatpush1.msra.mxu0 %v458
        %485 = vmatprep.subr.mxu0 0.0
        %486 = vmatpush1.msra.mxu0 %v459
        %487 = vmatprep.subr.mxu0 0.0
        %488 = vmatpush1.msra.mxu0 %v460
        %489 = vmatprep.subr.mxu0 0.0
        %490 = vmatpush1.msra.mxu0 %v461
        %491 = vmatprep.subr.mxu0 0.0
        %492 = vmatpush1.msra.mxu0 %v462
        %493 = vmatprep.subr.mxu0 0.0
        %494 = vmatpush1.msra.mxu0 %v463
        %495 = vmatprep.subr.mxu0 0.0
        %496 = vmatpush1.msra.mxu0 %v464
        %497 = vmatprep.subr.mxu0 0.0
        %498 = vmatpush1.msra.mxu0 0.0
        %499 = vmatprep.subr.mxu0 0.0
        %500 = vmatpush1.msra.mxu0 0.0
        %501 = vmatprep.subr.mxu0 0.0
        %502 = vmatpush1.msra.mxu0 0.0
        %503 = vmatprep.subr.mxu0 0.0
        %504 = vmatpush1.msra.mxu0 0.0
        %505 = vmatprep.subr.mxu0 0.0
        %506 = vmatpush1.msra.mxu0 0.0
        %507 = vmatprep.subr.mxu0 0.0
        %508 = vmatpush1.msra.mxu0 0.0
        %509 = vmatprep.subr.mxu0 0.0
        %510 = vmatpush1.msra.mxu0 0.0
        %511 = vmatprep.subr.mxu0 0.0
        %512 = vmatpush1.msra.mxu0 0.0
        %513 = vmatprep.subr.mxu0 0.0
        %514 = vmatpush1.msra.mxu0 0.0
        %515 = vmatprep.subr.mxu0 0.0
        %516 = vmatpush1.msra.mxu0 0.0
        %517 = vmatprep.subr.mxu0 0.0
        %518 = vmatpush1.msra.mxu0 0.0
        %519 = vmatprep.subr.mxu0 0.0
        %520 = vmatpush1.msra.mxu0 0.0
        %521 = vmatprep.subr.mxu0 0.0
        %522 = vmatpush1.msra.mxu0 0.0
        %523 = vmatprep.subr.mxu0 0.0
        %524 = vmatpush1.msra.mxu0 0.0
        %525 = vmatprep.subr.mxu0 0.0
        %526 = vmatpush1.msra.mxu0 0.0
        %527 = vmatprep.subr.mxu0 0.0
        %528 = vmatpush1.msra.mxu0 0.0
        %529 = vmatprep.mubr.f32.mxu0 0.0
        %530 = vmatmul.mubr.f32.gmra.mrb[0].mxu0 %v433
        %v531 = vpop.f32.mrb[0].mxu0
        %v532 = vadd.f32 0.0, %v531
        %v533 = vpop.f32.mrb[0].mxu0
        %534 = vmatprep.mubr.f32.mxu0 0.0
        %535 = vmatmul.mubr.f32.gmra.mrb[0].mxu0 %v434
        %v536 = vpop.f32.mrb[0].mxu0
        %v537 = vadd.f32 0.0, %v536
        %v538 = vpop.f32.mrb[0].mxu0
        %539 = vmatprep.mubr.f32.mxu0 0.0
        %540 = vmatmul.mubr.f32.gmra.mrb[0].mxu0 %v435
        %v541 = vpop.f32.mrb[0].mxu0
        %v542 = vadd.f32 0.0, %v541
        %v543 = vpop.f32.mrb[0].mxu0
        %544 = vmatprep.mubr.f32.mxu0 0.0
        %545 = vmatmul.mubr.f32.gmra.mrb[0].mxu0 %v436
        %v546 = vpop.f32.mrb[0].mxu0
        %v547 = vadd.f32 0.0, %v546
        %v548 = vpop.f32.mrb[0].mxu0
        %549 = vmatprep.mubr.f32.mxu0 0.0
        %550 = vmatmul.mubr.f32.gmra.mrb[0].mxu0 %v437
        %v551 = vpop.f32.mrb[0].mxu0
        %v552 = vadd.f32 0.0, %v551
        %v553 = vpop.f32.mrb[0].mxu0
        %554 = vmatprep.mubr.f32.mxu0 0.0
        %555 = vmatmul.mubr.f32.gmra.mrb[0].mxu0 %v438
        %v556 = vpop.f32.mrb[0].mxu0
        %v557 = vadd.f32 0.0, %v556
        %v558 = vpop.f32.mrb[0].mxu0
        %559 = vmatprep.mubr.f32.mxu0 0.0
        %560 = vmatmul.mubr.f32.gmra.mrb[0].mxu0 %v439
        %v561 = vpop.f32.mrb[0].mxu0
        %v562 = vadd.f32 0.0, %v561
        %v563 = vpop.f32.mrb[0].mxu0
        %564 = vmatprep.mubr.f32.mxu0 0.0
        %565 = vmatmul.mubr.f32.gmra.mrb[0].mxu0 %v440
        %v566 = vpop.f32.mrb[0].mxu0
        %v567 = vadd.f32 0.0, %v566
        %v568 = vpop.f32.mrb[0].mxu0
        %569 = vmatprep.mubr.f32.mxu0 0.0
        %570 = vmatmul.mubr.f32.gmra.mrb[0].mxu0 %v441
        %v571 = vpop.f32.mrb[0].mxu0
        %v572 = vadd.f32 0.0, %v571
        %v573 = vpop.f32.mrb[0].mxu0
        %574 = vmatprep.mubr.f32.mxu0 0.0
        %575 = vmatmul.mubr.f32.gmra.mrb[0].mxu0 %v442
        %v576 = vpop.f32.mrb[0].mxu0
        %v577 = vadd.f32 0.0, %v576
        %v578 = vpop.f32.mrb[0].mxu0
        %579 = vmatprep.mubr.f32.mxu0 0.0
        %580 = vmatmul.mubr.f32.gmra.mrb[0].mxu0 %v443
        %v581 = vpop.f32.mrb[0].mxu0
        %v582 = vadd.f32 0.0, %v581
        %v583 = vpop.f32.mrb[0].mxu0
        %584 = vmatprep.mubr.f32.mxu0 0.0
        %585 = vmatmul.mubr.f32.gmra.mrb[0].mxu0 %v444
        %v586 = vpop.f32.mrb[0].mxu0
        %v587 = vadd.f32 0.0, %v586
        %v588 = vpop.f32.mrb[0].mxu0
        %589 = vmatprep.mubr.f32.mxu0 0.0
        %590 = vmatmul.mubr.f32.gmra.mrb[0].mxu0 %v445
        %v591 = vpop.f32.mrb[0].mxu0
        %v592 = vadd.f32 0.0, %v591
        %v593 = vpop.f32.mrb[0].mxu0
        %594 = vmatprep.mubr.f32.mxu0 0.0
        %595 = vmatmul.mubr.f32.gmra.mrb[0].mxu0 %v446
        %v596 = vpop.f32.mrb[0].mxu0
        %v597 = vadd.f32 0.0, %v596
        %v598 = vpop.f32.mrb[0].mxu0
        %599 = vmatprep.mubr.f32.mxu0 0.0
        %600 = vmatmul.mubr.f32.gmra.mrb[0].mxu0 %v447
        %v601 = vpop.f32.mrb[0].mxu0
        %v602 = vadd.f32 0.0, %v601
        %v603 = vpop.f32.mrb[0].mxu0
        %604 = vmatprep.mubr.f32.mxu0 0.0
        %605 = vmatmul.mubr.f32.gmra.mrb[0].mxu0 %v448
        %v606 = vpop.f32.mrb[0].mxu0
        %v607 = vadd.f32 0.0, %v606
        %v608 = vpop.f32.mrb[0].mxu0
        %609 = vdwg.mxu0
        %v610 = vld [vmem:[#allocation2] sm:$0xf]
        %v611 = vld [vmem:[%s3] sm:$0x1]
        %v613 = vlaneseq
        %v614 = vshrl.u32 %v613, 7
        %v615 = vsub.s32 0, %v614
        %v616 = vrot.slane %v611, %v615
        %vm618 = vcmask 31744
        %v620 = vsel %vm618, %v532, 0
        %v623 = vsel %vm618, %v537, 0
        %v626 = vsel %vm618, %v542, 0
        %v629 = vsel %vm618, %v547, 0
        %v632 = vsel %vm618, %v552, 0
        %v635 = vsel %vm618, %v557, 0
        %v638 = vsel %vm618, %v562, 0
        %v641 = vsel %vm618, %v567, 0
        %v644 = vsel %vm618, %v572, 0
        %v647 = vsel %vm618, %v577, 0
        %v650 = vsel %vm618, %v582, 0
        %v653 = vsel %vm618, %v587, 0
        %v656 = vsel %vm618, %v592, 0
        %v659 = vsel %vm618, %v597, 0
        %v662 = vsel %vm618, %v602, 0
        %v665 = vsel %vm618, %v607, 0
        %vm667 = vcmask 1043456
        %v669 = vsel %vm667, %v610, 0
        %671 = vmatprep.subr.mxu0 0.0
        %672 = vmatpush1.msra.mxu0 %v669
        %673 = vmatprep.subr.mxu0 0.0
        %674 = vmatpush1.msra.mxu0 0.0
        %675 = vmatprep.subr.mxu0 0.0
        %676 = vmatpush1.msra.mxu0 0.0
        %677 = vmatprep.subr.mxu0 0.0
        %678 = vmatpush1.msra.mxu0 0.0
        %679 = vmatprep.subr.mxu0 0.0
        %680 = vmatpush1.msra.mxu0 0.0
        %681 = vmatprep.subr.mxu0 0.0
        %682 = vmatpush1.msra.mxu0 0.0
        %683 = vmatprep.subr.mxu0 0.0
        %684 = vmatpush1.msra.mxu0 0.0
        %685 = vmatprep.subr.mxu0 0.0
        %686 = vmatpush1.msra.mxu0 0.0
        %687 = vmatprep.subr.mxu0 0.0
        %688 = vmatpush1.msra.mxu0 0.0
        %689 = vmatprep.subr.mxu0 0.0
        %690 = vmatpush1.msra.mxu0 0.0
        %691 = vmatprep.subr.mxu0 0.0
        %692 = vmatpush1.msra.mxu0 0.0
        %693 = vmatprep.subr.mxu0 0.0
        %694 = vmatpush1.msra.mxu0 0.0
        %695 = vmatprep.subr.mxu0 0.0
        %696 = vmatpush1.msra.mxu0 0.0
        %697 = vmatprep.subr.mxu0 0.0
        %698 = vmatpush1.msra.mxu0 0.0
        %699 = vmatprep.subr.mxu0 0.0
        %700 = vmatpush1.msra.mxu0 0.0
        %701 = vmatprep.subr.mxu0 0.0
        %702 = vmatpush1.msra.mxu0 0.0
        %703 = vmatprep.subr.mxu0 0.0
        %704 = vmatpush1.msra.mxu0 0.0
        %705 = vmatprep.subr.mxu0 0.0
        %706 = vmatpush1.msra.mxu0 0.0
        %707 = vmatprep.subr.mxu0 0.0
        %708 = vmatpush1.msra.mxu0 0.0
        %709 = vmatprep.subr.mxu0 0.0
        %710 = vmatpush1.msra.mxu0 0.0
        %711 = vmatprep.subr.mxu0 0.0
        %712 = vmatpush1.msra.mxu0 0.0
        %713 = vmatprep.subr.mxu0 0.0
        %714 = vmatpush1.msra.mxu0 0.0
        %715 = vmatprep.subr.mxu0 0.0
        %716 = vmatpush1.msra.mxu0 0.0
        %717 = vmatprep.subr.mxu0 0.0
        %718 = vmatpush1.msra.mxu0 0.0
        %719 = vmatprep.subr.mxu0 0.0
        %720 = vmatpush1.msra.mxu0 0.0
        %721 = vmatprep.subr.mxu0 0.0
        %722 = vmatpush1.msra.mxu0 0.0
        %723 = vmatprep.subr.mxu0 0.0
        %724 = vmatpush1.msra.mxu0 0.0
        %725 = vmatprep.subr.mxu0 0.0
        %726 = vmatpush1.msra.mxu0 0.0
        %727 = vmatprep.subr.mxu0 0.0
        %728 = vmatpush1.msra.mxu0 0.0
        %729 = vmatprep.subr.mxu0 0.0
        %730 = vmatpush1.msra.mxu0 0.0
        %731 = vmatprep.subr.mxu0 0.0
        %732 = vmatpush1.msra.mxu0 0.0
        %733 = vmatprep.subr.mxu0 0.0
        %734 = vmatpush1.msra.mxu0 0.0
        %735 = vmatprep.mubr.f32.mxu0 0.0
        %736 = vmatmul.mubr.f32.gmra.mrb[0].mxu0 %v620
        %v737 = vpop.f32.mrb[0].mxu0
        %v738 = vadd.f32 %v616, %v737
        %v739 = vpop.f32.mrb[0].mxu0
        %740 = vmatprep.mubr.f32.mxu0 0.0
        %741 = vmatmul.mubr.f32.gmra.mrb[0].mxu0 %v623
        %v742 = vpop.f32.mrb[0].mxu0
        %v743 = vadd.f32 %v616, %v742
        %v744 = vpop.f32.mrb[0].mxu0
        %745 = vmatprep.mubr.f32.mxu0 0.0
        %746 = vmatmul.mubr.f32.gmra.mrb[0].mxu0 %v626
        %v747 = vpop.f32.mrb[0].mxu0
        %v748 = vadd.f32 %v616, %v747
        %v749 = vpop.f32.mrb[0].mxu0
        %750 = vmatprep.mubr.f32.mxu0 0.0
        %751 = vmatmul.mubr.f32.gmra.mrb[0].mxu0 %v629
        %v752 = vpop.f32.mrb[0].mxu0
        %v753 = vadd.f32 %v616, %v752
        %v754 = vpop.f32.mrb[0].mxu0
        %755 = vmatprep.mubr.f32.mxu0 0.0
        %756 = vmatmul.mubr.f32.gmra.mrb[0].mxu0 %v632
        %v757 = vpop.f32.mrb[0].mxu0
        %v758 = vadd.f32 %v616, %v757
        %v759 = vpop.f32.mrb[0].mxu0
        %760 = vmatprep.mubr.f32.mxu0 0.0
        %761 = vmatmul.mubr.f32.gmra.mrb[0].mxu0 %v635
        %v762 = vpop.f32.mrb[0].mxu0
        %v763 = vadd.f32 %v616, %v762
        %v764 = vpop.f32.mrb[0].mxu0
        %765 = vmatprep.mubr.f32.mxu0 0.0
        %766 = vmatmul.mubr.f32.gmra.mrb[0].mxu0 %v638
        %v767 = vpop.f32.mrb[0].mxu0
        %v768 = vadd.f32 %v616, %v767
        %v769 = vpop.f32.mrb[0].mxu0
        %770 = vmatprep.mubr.f32.mxu0 0.0
        %771 = vmatmul.mubr.f32.gmra.mrb[0].mxu0 %v641
        %v772 = vpop.f32.mrb[0].mxu0
        %v773 = vadd.f32 %v616, %v772
        %v774 = vpop.f32.mrb[0].mxu0
        %775 = vmatprep.mubr.f32.mxu0 0.0
        %776 = vmatmul.mubr.f32.gmra.mrb[0].mxu0 %v644
        %v777 = vpop.f32.mrb[0].mxu0
        %v778 = vadd.f32 %v616, %v777
        %v779 = vpop.f32.mrb[0].mxu0
        %780 = vmatprep.mubr.f32.mxu0 0.0
        %781 = vmatmul.mubr.f32.gmra.mrb[0].mxu0 %v647
        %v782 = vpop.f32.mrb[0].mxu0
        %v783 = vadd.f32 %v616, %v782
        %v784 = vpop.f32.mrb[0].mxu0
        %785 = vmatprep.mubr.f32.mxu0 0.0
        %786 = vmatmul.mubr.f32.gmra.mrb[0].mxu0 %v650
        %v787 = vpop.f32.mrb[0].mxu0
        %v788 = vadd.f32 %v616, %v787
        %v789 = vpop.f32.mrb[0].mxu0
        %790 = vmatprep.mubr.f32.mxu0 0.0
        %791 = vmatmul.mubr.f32.gmra.mrb[0].mxu0 %v653
        %v792 = vpop.f32.mrb[0].mxu0
        %v793 = vadd.f32 %v616, %v792
        %v794 = vpop.f32.mrb[0].mxu0
        %795 = vmatprep.mubr.f32.mxu0 0.0
        %796 = vmatmul.mubr.f32.gmra.mrb[0].mxu0 %v656
        %v797 = vpop.f32.mrb[0].mxu0
        %v798 = vadd.f32 %v616, %v797
        %v799 = vpop.f32.mrb[0].mxu0
        %800 = vmatprep.mubr.f32.mxu0 0.0
        %801 = vmatmul.mubr.f32.gmra.mrb[0].mxu0 %v659
        %v802 = vpop.f32.mrb[0].mxu0
        %v803 = vadd.f32 %v616, %v802
        %v804 = vpop.f32.mrb[0].mxu0
        %805 = vmatprep.mubr.f32.mxu0 0.0
        %806 = vmatmul.mubr.f32.gmra.mrb[0].mxu0 %v662
        %v807 = vpop.f32.mrb[0].mxu0
        %v808 = vadd.f32 %v616, %v807
        %v809 = vpop.f32.mrb[0].mxu0
        %810 = vmatprep.mubr.f32.mxu0 0.0
        %811 = vmatmul.mubr.f32.gmra.mrb[0].mxu0 %v665
        %v812 = vpop.f32.mrb[0].mxu0
        %v813 = vadd.f32 %v616, %v812
        %v814 = vpop.f32.mrb[0].mxu0
        %815 = vdwg.mxu0
        %v816 = vmax.f32 %v738, 0.0
        %v817 = vmax.f32 %v743, 0.0
        %v818 = vmax.f32 %v748, 0.0
        %v819 = vmax.f32 %v753, 0.0
        %v820 = vmax.f32 %v758, 0.0
        %v821 = vmax.f32 %v763, 0.0
        %v822 = vmax.f32 %v768, 0.0
        %v823 = vmax.f32 %v773, 0.0
        %v824 = vmax.f32 %v778, 0.0
        %v825 = vmax.f32 %v783, 0.0
        %v826 = vmax.f32 %v788, 0.0
        %v827 = vmax.f32 %v793, 0.0
        %v828 = vmax.f32 %v798, 0.0
        %v829 = vmax.f32 %v803, 0.0
        %v830 = vmax.f32 %v808, 0.0
        %v831 = vmax.f32 %v813, 0.0
        %v832 = vld [vmem:[%s4] sm:$0xff]
        %v833 = vld [vmem:[%s4 + $0x8] sm:$0xff]
        %v834 = vld [vmem:[%s4 + $0x10] sm:$0xff]
        %v835 = vld [vmem:[%s4 + $0x18] sm:$0xff]
        %vm836 = vcmask 261120
        %v838 = vsel %vm836, %v816, 0
        %v841 = vsel %vm836, %v817, 0
        %v844 = vsel %vm836, %v818, 0
        %v847 = vsel %vm836, %v819, 0
        %v850 = vsel %vm836, %v820, 0
        %v853 = vsel %vm836, %v821, 0
        %v856 = vsel %vm836, %v822, 0
        %v859 = vsel %vm836, %v823, 0
        %v862 = vsel %vm836, %v824, 0
        %v865 = vsel %vm836, %v825, 0
        %v868 = vsel %vm836, %v826, 0
        %v871 = vsel %vm836, %v827, 0
        %v874 = vsel %vm836, %v828, 0
        %v877 = vsel %vm836, %v829, 0
        %v880 = vsel %vm836, %v830, 0
        %v883 = vsel %vm836, %v831, 0
        %885 = vmatprep.subr.mxu0 0.0
        %886 = vmatpush1.msra.mxu0 %v832
        %887 = vmatprep.subr.mxu0 0.0
        %888 = vmatpush1.msra.mxu0 %v833
        %889 = vmatprep.subr.mxu0 0.0
        %890 = vmatpush1.msra.mxu0 %v834
        %891 = vmatprep.subr.mxu0 0.0
        %892 = vmatpush1.msra.mxu0 %v835
        %893 = vmatprep.subr.mxu0 0.0
        %894 = vmatpush1.msra.mxu0 0.0
        %895 = vmatprep.subr.mxu0 0.0
        %896 = vmatpush1.msra.mxu0 0.0
        %897 = vmatprep.subr.mxu0 0.0
        %898 = vmatpush1.msra.mxu0 0.0
        %899 = vmatprep.subr.mxu0 0.0
        %900 = vmatpush1.msra.mxu0 0.0
        %901 = vmatprep.subr.mxu0 0.0
        %902 = vmatpush1.msra.mxu0 0.0
        %903 = vmatprep.subr.mxu0 0.0
        %904 = vmatpush1.msra.mxu0 0.0
        %905 = vmatprep.subr.mxu0 0.0
        %906 = vmatpush1.msra.mxu0 0.0
        %907 = vmatprep.subr.mxu0 0.0
        %908 = vmatpush1.msra.mxu0 0.0
        %909 = vmatprep.subr.mxu0 0.0
        %910 = vmatpush1.msra.mxu0 0.0
        %911 = vmatprep.subr.mxu0 0.0
        %912 = vmatpush1.msra.mxu0 0.0
        %913 = vmatprep.subr.mxu0 0.0
        %914 = vmatpush1.msra.mxu0 0.0
        %915 = vmatprep.subr.mxu0 0.0
        %916 = vmatpush1.msra.mxu0 0.0
        %917 = vmatprep.subr.mxu0 0.0
        %918 = vmatpush1.msra.mxu0 0.0
        %919 = vmatprep.subr.mxu0 0.0
        %920 = vmatpush1.msra.mxu0 0.0
        %921 = vmatprep.subr.mxu0 0.0
        %922 = vmatpush1.msra.mxu0 0.0
        %923 = vmatprep.subr.mxu0 0.0
        %924 = vmatpush1.msra.mxu0 0.0
        %925 = vmatprep.subr.mxu0 0.0
        %926 = vmatpush1.msra.mxu0 0.0
        %927 = vmatprep.subr.mxu0 0.0
        %928 = vmatpush1.msra.mxu0 0.0
        %929 = vmatprep.subr.mxu0 0.0
        %930 = vmatpush1.msra.mxu0 0.0
        %931 = vmatprep.subr.mxu0 0.0
        %932 = vmatpush1.msra.mxu0 0.0
        %933 = vmatprep.subr.mxu0 0.0
        %934 = vmatpush1.msra.mxu0 0.0
        %935 = vmatprep.subr.mxu0 0.0
        %936 = vmatpush1.msra.mxu0 0.0
        %937 = vmatprep.subr.mxu0 0.0
        %938 = vmatpush1.msra.mxu0 0.0
        %939 = vmatprep.subr.mxu0 0.0
        %940 = vmatpush1.msra.mxu0 0.0
        %941 = vmatprep.subr.mxu0 0.0
        %942 = vmatpush1.msra.mxu0 0.0
        %943 = vmatprep.subr.mxu0 0.0
        %944 = vmatpush1.msra.mxu0 0.0
        %945 = vmatprep.subr.mxu0 0.0
        %946 = vmatpush1.msra.mxu0 0.0
        %947 = vmatprep.subr.mxu0 0.0
        %948 = vmatpush1.msra.mxu0 0.0
        %949 = vmatprep.mubr.f32.mxu0 0.0
        %950 = vmatmul.mubr.f32.gmra.mrb[0].mxu0 %v838
        %v951 = vpop.f32.mrb[0].mxu0
        %v952 = vadd.f32 0.0, %v951
        %v953 = vpop.f32.mrb[0].mxu0
        %954 = vmatprep.mubr.f32.mxu0 0.0
        %955 = vmatmul.mubr.f32.gmra.mrb[0].mxu0 %v841
        %v956 = vpop.f32.mrb[0].mxu0
        %v957 = vadd.f32 0.0, %v956
        %v958 = vpop.f32.mrb[0].mxu0
        %959 = vmatprep.mubr.f32.mxu0 0.0
        %960 = vmatmul.mubr.f32.gmra.mrb[0].mxu0 %v844
        %v961 = vpop.f32.mrb[0].mxu0
        %v962 = vadd.f32 0.0, %v961
        %v963 = vpop.f32.mrb[0].mxu0
        %964 = vmatprep.mubr.f32.mxu0 0.0
        %965 = vmatmul.mubr.f32.gmra.mrb[0].mxu0 %v847
        %v966 = vpop.f32.mrb[0].mxu0
        %v967 = vadd.f32 0.0, %v966
        %v968 = vpop.f32.mrb[0].mxu0
        %969 = vmatprep.mubr.f32.mxu0 0.0
        %970 = vmatmul.mubr.f32.gmra.mrb[0].mxu0 %v850
        %v971 = vpop.f32.mrb[0].mxu0
        %v972 = vadd.f32 0.0, %v971
        %v973 = vpop.f32.mrb[0].mxu0
        %974 = vmatprep.mubr.f32.mxu0 0.0
        %975 = vmatmul.mubr.f32.gmra.mrb[0].mxu0 %v853
        %v976 = vpop.f32.mrb[0].mxu0
        %v977 = vadd.f32 0.0, %v976
        %v978 = vpop.f32.mrb[0].mxu0
        %979 = vmatprep.mubr.f32.mxu0 0.0
        %980 = vmatmul.mubr.f32.gmra.mrb[0].mxu0 %v856
        %v981 = vpop.f32.mrb[0].mxu0
        %v982 = vadd.f32 0.0, %v981
        %v983 = vpop.f32.mrb[0].mxu0
        %984 = vmatprep.mubr.f32.mxu0 0.0
        %985 = vmatmul.mubr.f32.gmra.mrb[0].mxu0 %v859
        %v986 = vpop.f32.mrb[0].mxu0
        %v987 = vadd.f32 0.0, %v986
        %v988 = vpop.f32.mrb[0].mxu0
        %989 = vmatprep.mubr.f32.mxu0 0.0
        %990 = vmatmul.mubr.f32.gmra.mrb[0].mxu0 %v862
        %v991 = vpop.f32.mrb[0].mxu0
        %v992 = vadd.f32 0.0, %v991
        %v993 = vpop.f32.mrb[0].mxu0
        %994 = vmatprep.mubr.f32.mxu0 0.0
        %995 = vmatmul.mubr.f32.gmra.mrb[0].mxu0 %v865
        %v996 = vpop.f32.mrb[0].mxu0
        %v997 = vadd.f32 0.0, %v996
        %v998 = vpop.f32.mrb[0].mxu0
        %999 = vmatprep.mubr.f32.mxu0 0.0
        %1000 = vmatmul.mubr.f32.gmra.mrb[0].mxu0 %v868
        %v1001 = vpop.f32.mrb[0].mxu0
        %v1002 = vadd.f32 0.0, %v1001
        %v1003 = vpop.f32.mrb[0].mxu0
        %1004 = vmatprep.mubr.f32.mxu0 0.0
        %1005 = vmatmul.mubr.f32.gmra.mrb[0].mxu0 %v871
        %v1006 = vpop.f32.mrb[0].mxu0
        %v1007 = vadd.f32 0.0, %v1006
        %v1008 = vpop.f32.mrb[0].mxu0
        %1009 = vmatprep.mubr.f32.mxu0 0.0
        %1010 = vmatmul.mubr.f32.gmra.mrb[0].mxu0 %v874
        %v1011 = vpop.f32.mrb[0].mxu0
        %v1012 = vadd.f32 0.0, %v1011
        %v1013 = vpop.f32.mrb[0].mxu0
        %1014 = vmatprep.mubr.f32.mxu0 0.0
        %1015 = vmatmul.mubr.f32.gmra.mrb[0].mxu0 %v877
        %v1016 = vpop.f32.mrb[0].mxu0
        %v1017 = vadd.f32 0.0, %v1016
        %v1018 = vpop.f32.mrb[0].mxu0
        %1019 = vmatprep.mubr.f32.mxu0 0.0
        %1020 = vmatmul.mubr.f32.gmra.mrb[0].mxu0 %v880
        %v1021 = vpop.f32.mrb[0].mxu0
        %v1022 = vadd.f32 0.0, %v1021
        %v1023 = vpop.f32.mrb[0].mxu0
        %1024 = vmatprep.mubr.f32.mxu0 0.0
        %1025 = vmatmul.mubr.f32.gmra.mrb[0].mxu0 %v883
        %v1026 = vpop.f32.mrb[0].mxu0
        %v1027 = vadd.f32 0.0, %v1026
        %v1028 = vpop.f32.mrb[0].mxu0
        %1029 = vdwg.mxu0
        %v1030 = vld [vmem:[%s5] sm:$0x1]
        %v1032 = vlaneseq
        %v1033 = vshrl.u32 %v1032, 7
        %v1034 = vsub.s32 0, %v1033
        %v1035 = vrot.slane %v1030, %v1034
        %1037 = vmatprep.subr.mxu0 0.0
        %1038 = vmatpush1.msra.mxu0 %v952
        %1039 = vmatprep.subr.mxu0 0.0
        %1040 = vmatpush1.msra.mxu0 %v957
        %1041 = vmatprep.subr.mxu0 0.0
        %1042 = vmatpush1.msra.mxu0 %v962
        %1043 = vmatprep.subr.mxu0 0.0
        %1044 = vmatpush1.msra.mxu0 %v967
        %1045 = vmatprep.subr.mxu0 0.0
        %1046 = vmatpush1.msra.mxu0 %v972
        %1047 = vmatprep.subr.mxu0 0.0
        %1048 = vmatpush1.msra.mxu0 %v977
        %1049 = vmatprep.subr.mxu0 0.0
        %1050 = vmatpush1.msra.mxu0 %v982
        %1051 = vmatprep.subr.mxu0 0.0
        %1052 = vmatpush1.msra.mxu0 %v987
        %1053 = vmatprep.subr.mxu0 0.0
        %1054 = vmatpush1.msra.mxu0 %v992
        %1055 = vmatprep.subr.mxu0 0.0
        %1056 = vmatpush1.msra.mxu0 %v997
        %1057 = vmatprep.subr.mxu0 0.0
        %1058 = vmatpush1.msra.mxu0 %v1002
        %1059 = vmatprep.subr.mxu0 0.0
        %1060 = vmatpush1.msra.mxu0 %v1007
        %1061 = vmatprep.subr.mxu0 0.0
        %1062 = vmatpush1.msra.mxu0 %v1012
        %1063 = vmatprep.subr.mxu0 0.0
        %1064 = vmatpush1.msra.mxu0 %v1017
        %1065 = vmatprep.subr.mxu0 0.0
        %1066 = vmatpush1.msra.mxu0 %v1022
        %1067 = vmatprep.subr.mxu0 0.0
        %1068 = vmatpush1.msra.mxu0 %v1027
        %1069 = vmatprep.subr.mxu0 0.0
        %1070 = vmatpush1.msra.mxu0 0.0
        %1071 = vmatprep.subr.mxu0 0.0
        %1072 = vmatpush1.msra.mxu0 0.0
        %1073 = vmatprep.subr.mxu0 0.0
        %1074 = vmatpush1.msra.mxu0 0.0
        %1075 = vmatprep.subr.mxu0 0.0
        %1076 = vmatpush1.msra.mxu0 0.0
        %1077 = vmatprep.subr.mxu0 0.0
        %1078 = vmatpush1.msra.mxu0 0.0
        %1079 = vmatprep.subr.mxu0 0.0
        %1080 = vmatpush1.msra.mxu0 0.0
        %1081 = vmatprep.subr.mxu0 0.0
        %1082 = vmatpush1.msra.mxu0 0.0
        %1083 = vmatprep.subr.mxu0 0.0
        %1084 = vmatpush1.msra.mxu0 0.0
        %1085 = vmatprep.subr.mxu0 0.0
        %1086 = vmatpush1.msra.mxu0 0.0
        %1087 = vmatprep.subr.mxu0 0.0
        %1088 = vmatpush1.msra.mxu0 0.0
        %1089 = vmatprep.subr.mxu0 0.0
        %1090 = vmatpush1.msra.mxu0 0.0
        %1091 = vmatprep.subr.mxu0 0.0
        %1092 = vmatpush1.msra.mxu0 0.0
        %1093 = vmatprep.subr.mxu0 0.0
        %1094 = vmatpush1.msra.mxu0 0.0
        %1095 = vmatprep.subr.mxu0 0.0
        %1096 = vmatpush1.msra.mxu0 0.0
        %1097 = vmatprep.subr.mxu0 0.0
        %1098 = vmatpush1.msra.mxu0 0.0
        %1099 = vmatprep.subr.mxu0 0.0
        %1100 = vmatpush1.msra.mxu0 0.0
        %1101 = vmatprep.mubr.f32.mxu0 0.0
        %1102 = vmatmul.mubr.f32.gmra.mrb[0].mxu0 %v433
        %v1103 = vpop.f32.mrb[0].mxu0
        %v1104 = vadd.f32 %v1035, %v1103
        %v1105 = vpop.f32.mrb[0].mxu0
        %1106 = vmatprep.mubr.f32.mxu0 0.0
        %1107 = vmatmul.mubr.f32.gmra.mrb[0].mxu0 %v434
        %v1108 = vpop.f32.mrb[0].mxu0
        %v1109 = vadd.f32 %v1035, %v1108
        %v1110 = vpop.f32.mrb[0].mxu0
        %1111 = vmatprep.mubr.f32.mxu0 0.0
        %1112 = vmatmul.mubr.f32.gmra.mrb[0].mxu0 %v435
        %v1113 = vpop.f32.mrb[0].mxu0
        %v1114 = vadd.f32 %v1035, %v1113
        %v1115 = vpop.f32.mrb[0].mxu0
        %1116 = vmatprep.mubr.f32.mxu0 0.0
        %1117 = vmatmul.mubr.f32.gmra.mrb[0].mxu0 %v436
        %v1118 = vpop.f32.mrb[0].mxu0
        %v1119 = vadd.f32 %v1035, %v1118
        %v1120 = vpop.f32.mrb[0].mxu0
        %1121 = vmatprep.mubr.f32.mxu0 0.0
        %1122 = vmatmul.mubr.f32.gmra.mrb[0].mxu0 %v437
        %v1123 = vpop.f32.mrb[0].mxu0
        %v1124 = vadd.f32 %v1035, %v1123
        %v1125 = vpop.f32.mrb[0].mxu0
        %1126 = vmatprep.mubr.f32.mxu0 0.0
        %1127 = vmatmul.mubr.f32.gmra.mrb[0].mxu0 %v438
        %v1128 = vpop.f32.mrb[0].mxu0
        %v1129 = vadd.f32 %v1035, %v1128
        %v1130 = vpop.f32.mrb[0].mxu0
        %1131 = vmatprep.mubr.f32.mxu0 0.0
        %1132 = vmatmul.mubr.f32.gmra.mrb[0].mxu0 %v439
        %v1133 = vpop.f32.mrb[0].mxu0
        %v1134 = vadd.f32 %v1035, %v1133
        %v1135 = vpop.f32.mrb[0].mxu0
        %1136 = vmatprep.mubr.f32.mxu0 0.0
        %1137 = vmatmul.mubr.f32.gmra.mrb[0].mxu0 %v440
        %v1138 = vpop.f32.mrb[0].mxu0
        %v1139 = vadd.f32 %v1035, %v1138
        %v1140 = vpop.f32.mrb[0].mxu0
        %1141 = vmatprep.mubr.f32.mxu0 0.0
        %1142 = vmatmul.mubr.f32.gmra.mrb[0].mxu0 %v441
        %v1143 = vpop.f32.mrb[0].mxu0
        %v1144 = vadd.f32 %v1035, %v1143
        %v1145 = vpop.f32.mrb[0].mxu0
        %1146 = vmatprep.mubr.f32.mxu0 0.0
        %1147 = vmatmul.mubr.f32.gmra.mrb[0].mxu0 %v442
        %v1148 = vpop.f32.mrb[0].mxu0
        %v1149 = vadd.f32 %v1035, %v1148
        %v1150 = vpop.f32.mrb[0].mxu0
        %1151 = vmatprep.mubr.f32.mxu0 0.0
        %1152 = vmatmul.mubr.f32.gmra.mrb[0].mxu0 %v443
        %v1153 = vpop.f32.mrb[0].mxu0
        %v1154 = vadd.f32 %v1035, %v1153
        %v1155 = vpop.f32.mrb[0].mxu0
        %1156 = vmatprep.mubr.f32.mxu0 0.0
        %1157 = vmatmul.mubr.f32.gmra.mrb[0].mxu0 %v444
        %v1158 = vpop.f32.mrb[0].mxu0
        %v1159 = vadd.f32 %v1035, %v1158
        %v1160 = vpop.f32.mrb[0].mxu0
        %1161 = vmatprep.mubr.f32.mxu0 0.0
        %1162 = vmatmul.mubr.f32.gmra.mrb[0].mxu0 %v445
        %v1163 = vpop.f32.mrb[0].mxu0
        %v1164 = vadd.f32 %v1035, %v1163
        %v1165 = vpop.f32.mrb[0].mxu0
        %1166 = vmatprep.mubr.f32.mxu0 0.0
        %1167 = vmatmul.mubr.f32.gmra.mrb[0].mxu0 %v446
        %v1168 = vpop.f32.mrb[0].mxu0
        %v1169 = vadd.f32 %v1035, %v1168
        %v1170 = vpop.f32.mrb[0].mxu0
        %1171 = vmatprep.mubr.f32.mxu0 0.0
        %1172 = vmatmul.mubr.f32.gmra.mrb[0].mxu0 %v447
        %v1173 = vpop.f32.mrb[0].mxu0
        %v1174 = vadd.f32 %v1035, %v1173
        %v1175 = vpop.f32.mrb[0].mxu0
        %1176 = vmatprep.mubr.f32.mxu0 0.0
        %1177 = vmatmul.mubr.f32.gmra.mrb[0].mxu0 %v448
        %v1178 = vpop.f32.mrb[0].mxu0
        %v1179 = vadd.f32 %v1035, %v1178
        %v1180 = vpop.f32.mrb[0].mxu0
        %1181 = vdwg.mxu0
        %v1182 = vmax.f32 %v1104, 0.0
        %v1183 = vmax.f32 %v1109, 0.0
        %v1184 = vmax.f32 %v1114, 0.0
        %v1185 = vmax.f32 %v1119, 0.0
        %v1186 = vmax.f32 %v1124, 0.0
        %v1187 = vmax.f32 %v1129, 0.0
        %v1188 = vmax.f32 %v1134, 0.0
        %v1189 = vmax.f32 %v1139, 0.0
        %v1190 = vmax.f32 %v1144, 0.0
        %v1191 = vmax.f32 %v1149, 0.0
        %v1192 = vmax.f32 %v1154, 0.0
        %v1193 = vmax.f32 %v1159, 0.0
        %v1194 = vmax.f32 %v1164, 0.0
        %v1195 = vmax.f32 %v1169, 0.0
        %v1196 = vmax.f32 %v1174, 0.0
        %v1197 = vmax.f32 %v1179, 0.0
        %v1198 = vld [vmem:[%s6] sm:$0xff]
        %v1199 = vld [vmem:[%s6 + $0x8] sm:$0xff]
        %v1200 = vld [vmem:[%s6 + $0x10] sm:$0xff]
        %v1201 = vld [vmem:[%s6 + $0x18] sm:$0xff]
        %v1203 = vsel %vm836, %v1182, 0
        %v1206 = vsel %vm836, %v1183, 0
        %v1209 = vsel %vm836, %v1184, 0
        %v1212 = vsel %vm836, %v1185, 0
        %v1215 = vsel %vm836, %v1186, 0
        %v1218 = vsel %vm836, %v1187, 0
        %v1221 = vsel %vm836, %v1188, 0
        %v1224 = vsel %vm836, %v1189, 0
        %v1227 = vsel %vm836, %v1190, 0
        %v1230 = vsel %vm836, %v1191, 0
        %v1233 = vsel %vm836, %v1192, 0
        %v1236 = vsel %vm836, %v1193, 0
        %v1239 = vsel %vm836, %v1194, 0
        %v1242 = vsel %vm836, %v1195, 0
        %v1245 = vsel %vm836, %v1196, 0
        %v1248 = vsel %vm836, %v1197, 0
        %1250 = vmatprep.subr.mxu0 0.0
        %1251 = vmatpush1.msra.mxu0 %v1198
        %1252 = vmatprep.subr.mxu0 0.0
        %1253 = vmatpush1.msra.mxu0 %v1199
        %1254 = vmatprep.subr.mxu0 0.0
        %1255 = vmatpush1.msra.mxu0 %v1200
        %1256 = vmatprep.subr.mxu0 0.0
        %1257 = vmatpush1.msra.mxu0 %v1201
        %1258 = vmatprep.subr.mxu0 0.0
        %1259 = vmatpush1.msra.mxu0 0.0
        %1260 = vmatprep.subr.mxu0 0.0
        %1261 = vmatpush1.msra.mxu0 0.0
        %1262 = vmatprep.subr.mxu0 0.0
        %1263 = vmatpush1.msra.mxu0 0.0
        %1264 = vmatprep.subr.mxu0 0.0
        %1265 = vmatpush1.msra.mxu0 0.0
        %1266 = vmatprep.subr.mxu0 0.0
        %1267 = vmatpush1.msra.mxu0 0.0
        %1268 = vmatprep.subr.mxu0 0.0
        %1269 = vmatpush1.msra.mxu0 0.0
        %1270 = vmatprep.subr.mxu0 0.0
        %1271 = vmatpush1.msra.mxu0 0.0
        %1272 = vmatprep.subr.mxu0 0.0
        %1273 = vmatpush1.msra.mxu0 0.0
        %1274 = vmatprep.subr.mxu0 0.0
        %1275 = vmatpush1.msra.mxu0 0.0
        %1276 = vmatprep.subr.mxu0 0.0
        %1277 = vmatpush1.msra.mxu0 0.0
        %1278 = vmatprep.subr.mxu0 0.0
        %1279 = vmatpush1.msra.mxu0 0.0
        %1280 = vmatprep.subr.mxu0 0.0
        %1281 = vmatpush1.msra.mxu0 0.0
        %1282 = vmatprep.subr.mxu0 0.0
        %1283 = vmatpush1.msra.mxu0 0.0
        %1284 = vmatprep.subr.mxu0 0.0
        %1285 = vmatpush1.msra.mxu0 0.0
        %1286 = vmatprep.subr.mxu0 0.0
        %1287 = vmatpush1.msra.mxu0 0.0
        %1288 = vmatprep.subr.mxu0 0.0
        %1289 = vmatpush1.msra.mxu0 0.0
        %1290 = vmatprep.subr.mxu0 0.0
        %1291 = vmatpush1.msra.mxu0 0.0
        %1292 = vmatprep.subr.mxu0 0.0
        %1293 = vmatpush1.msra.mxu0 0.0
        %1294 = vmatprep.subr.mxu0 0.0
        %1295 = vmatpush1.msra.mxu0 0.0
        %1296 = vmatprep.subr.mxu0 0.0
        %1297 = vmatpush1.msra.mxu0 0.0
        %1298 = vmatprep.subr.mxu0 0.0
        %1299 = vmatpush1.msra.mxu0 0.0
        %1300 = vmatprep.subr.mxu0 0.0
        %1301 = vmatpush1.msra.mxu0 0.0
        %1302 = vmatprep.subr.mxu0 0.0
        %1303 = vmatpush1.msra.mxu0 0.0
        %1304 = vmatprep.subr.mxu0 0.0
        %1305 = vmatpush1.msra.mxu0 0.0
        %1306 = vmatprep.subr.mxu0 0.0
        %1307 = vmatpush1.msra.mxu0 0.0
        %1308 = vmatprep.subr.mxu0 0.0
        %1309 = vmatpush1.msra.mxu0 0.0
        %1310 = vmatprep.subr.mxu0 0.0
        %1311 = vmatpush1.msra.mxu0 0.0
        %1312 = vmatprep.subr.mxu0 0.0
        %1313 = vmatpush1.msra.mxu0 0.0
        %1314 = vmatprep.mubr.f32.mxu0 0.0
        %1315 = vmatmul.mubr.f32.gmra.mrb[0].mxu0 %v1203
        %v1316 = vpop.f32.mrb[0].mxu0
        %v1317 = vadd.f32 0.0, %v1316
        %v1318 = vpop.f32.mrb[0].mxu0
        %1319 = vmatprep.mubr.f32.mxu0 0.0
        %1320 = vmatmul.mubr.f32.gmra.mrb[0].mxu0 %v1206
        %v1321 = vpop.f32.mrb[0].mxu0
        %v1322 = vadd.f32 0.0, %v1321
        %v1323 = vpop.f32.mrb[0].mxu0
        %1324 = vmatprep.mubr.f32.mxu0 0.0
        %1325 = vmatmul.mubr.f32.gmra.mrb[0].mxu0 %v1209
        %v1326 = vpop.f32.mrb[0].mxu0
        %v1327 = vadd.f32 0.0, %v1326
        %v1328 = vpop.f32.mrb[0].mxu0
        %1329 = vmatprep.mubr.f32.mxu0 0.0
        %1330 = vmatmul.mubr.f32.gmra.mrb[0].mxu0 %v1212
        %v1331 = vpop.f32.mrb[0].mxu0
        %v1332 = vadd.f32 0.0, %v1331
        %v1333 = vpop.f32.mrb[0].mxu0
        %1334 = vmatprep.mubr.f32.mxu0 0.0
        %1335 = vmatmul.mubr.f32.gmra.mrb[0].mxu0 %v1215
        %v1336 = vpop.f32.mrb[0].mxu0
        %v1337 = vadd.f32 0.0, %v1336
        %v1338 = vpop.f32.mrb[0].mxu0
        %1339 = vmatprep.mubr.f32.mxu0 0.0
        %1340 = vmatmul.mubr.f32.gmra.mrb[0].mxu0 %v1218
        %v1341 = vpop.f32.mrb[0].mxu0
        %v1342 = vadd.f32 0.0, %v1341
        %v1343 = vpop.f32.mrb[0].mxu0
        %1344 = vmatprep.mubr.f32.mxu0 0.0
        %1345 = vmatmul.mubr.f32.gmra.mrb[0].mxu0 %v1221
        %v1346 = vpop.f32.mrb[0].mxu0
        %v1347 = vadd.f32 0.0, %v1346
        %v1348 = vpop.f32.mrb[0].mxu0
        %1349 = vmatprep.mubr.f32.mxu0 0.0
        %1350 = vmatmul.mubr.f32.gmra.mrb[0].mxu0 %v1224
        %v1351 = vpop.f32.mrb[0].mxu0
        %v1352 = vadd.f32 0.0, %v1351
        %v1353 = vpop.f32.mrb[0].mxu0
        %1354 = vmatprep.mubr.f32.mxu0 0.0
        %1355 = vmatmul.mubr.f32.gmra.mrb[0].mxu0 %v1227
        %v1356 = vpop.f32.mrb[0].mxu0
        %v1357 = vadd.f32 0.0, %v1356
        %v1358 = vpop.f32.mrb[0].mxu0
        %1359 = vmatprep.mubr.f32.mxu0 0.0
        %1360 = vmatmul.mubr.f32.gmra.mrb[0].mxu0 %v1230
        %v1361 = vpop.f32.mrb[0].mxu0
        %v1362 = vadd.f32 0.0, %v1361
        %v1363 = vpop.f32.mrb[0].mxu0
        %1364 = vmatprep.mubr.f32.mxu0 0.0
        %1365 = vmatmul.mubr.f32.gmra.mrb[0].mxu0 %v1233
        %v1366 = vpop.f32.mrb[0].mxu0
        %v1367 = vadd.f32 0.0, %v1366
        %v1368 = vpop.f32.mrb[0].mxu0
        %1369 = vmatprep.mubr.f32.mxu0 0.0
        %1370 = vmatmul.mubr.f32.gmra.mrb[0].mxu0 %v1236
        %v1371 = vpop.f32.mrb[0].mxu0
        %v1372 = vadd.f32 0.0, %v1371
        %v1373 = vpop.f32.mrb[0].mxu0
        %1374 = vmatprep.mubr.f32.mxu0 0.0
        %1375 = vmatmul.mubr.f32.gmra.mrb[0].mxu0 %v1239
        %v1376 = vpop.f32.mrb[0].mxu0
        %v1377 = vadd.f32 0.0, %v1376
        %v1378 = vpop.f32.mrb[0].mxu0
        %1379 = vmatprep.mubr.f32.mxu0 0.0
        %1380 = vmatmul.mubr.f32.gmra.mrb[0].mxu0 %v1242
        %v1381 = vpop.f32.mrb[0].mxu0
        %v1382 = vadd.f32 0.0, %v1381
        %v1383 = vpop.f32.mrb[0].mxu0
        %1384 = vmatprep.mubr.f32.mxu0 0.0
        %1385 = vmatmul.mubr.f32.gmra.mrb[0].mxu0 %v1245
        %v1386 = vpop.f32.mrb[0].mxu0
        %v1387 = vadd.f32 0.0, %v1386
        %v1388 = vpop.f32.mrb[0].mxu0
        %1389 = vmatprep.mubr.f32.mxu0 0.0
        %1390 = vmatmul.mubr.f32.gmra.mrb[0].mxu0 %v1248
        %v1391 = vpop.f32.mrb[0].mxu0
        %v1392 = vadd.f32 0.0, %v1391
        %v1393 = vpop.f32.mrb[0].mxu0
        %1394 = vdwg.mxu0
        %v1395 = vld [vmem:[%s7] sm:$0x1]
        %v1397 = vlaneseq
        %v1398 = vshrl.u32 %v1397, 7
        %v1399 = vsub.s32 0, %v1398
        %v1400 = vrot.slane %v1395, %v1399
        %1402 = vmatprep.subr.mxu0 0.0
        %1403 = vmatpush1.msra.mxu0 %v1317
        %1404 = vmatprep.subr.mxu0 0.0
        %1405 = vmatpush1.msra.mxu0 %v1322
        %1406 = vmatprep.subr.mxu0 0.0
        %1407 = vmatpush1.msra.mxu0 %v1327
        %1408 = vmatprep.subr.mxu0 0.0
        %1409 = vmatpush1.msra.mxu0 %v1332
        %1410 = vmatprep.subr.mxu0 0.0
        %1411 = vmatpush1.msra.mxu0 %v1337
        %1412 = vmatprep.subr.mxu0 0.0
        %1413 = vmatpush1.msra.mxu0 %v1342
        %1414 = vmatprep.subr.mxu0 0.0
        %1415 = vmatpush1.msra.mxu0 %v1347
        %1416 = vmatprep.subr.mxu0 0.0
        %1417 = vmatpush1.msra.mxu0 %v1352
        %1418 = vmatprep.subr.mxu0 0.0
        %1419 = vmatpush1.msra.mxu0 %v1357
        %1420 = vmatprep.subr.mxu0 0.0
        %1421 = vmatpush1.msra.mxu0 %v1362
        %1422 = vmatprep.subr.mxu0 0.0
        %1423 = vmatpush1.msra.mxu0 %v1367
        %1424 = vmatprep.subr.mxu0 0.0
        %1425 = vmatpush1.msra.mxu0 %v1372
        %1426 = vmatprep.subr.mxu0 0.0
        %1427 = vmatpush1.msra.mxu0 %v1377
        %1428 = vmatprep.subr.mxu0 0.0
        %1429 = vmatpush1.msra.mxu0 %v1382
        %1430 = vmatprep.subr.mxu0 0.0
        %1431 = vmatpush1.msra.mxu0 %v1387
        %1432 = vmatprep.subr.mxu0 0.0
        %1433 = vmatpush1.msra.mxu0 %v1392
        %1434 = vmatprep.subr.mxu0 0.0
        %1435 = vmatpush1.msra.mxu0 0.0
        %1436 = vmatprep.subr.mxu0 0.0
        %1437 = vmatpush1.msra.mxu0 0.0
        %1438 = vmatprep.subr.mxu0 0.0
        %1439 = vmatpush1.msra.mxu0 0.0
        %1440 = vmatprep.subr.mxu0 0.0
        %1441 = vmatpush1.msra.mxu0 0.0
        %1442 = vmatprep.subr.mxu0 0.0
        %1443 = vmatpush1.msra.mxu0 0.0
        %1444 = vmatprep.subr.mxu0 0.0
        %1445 = vmatpush1.msra.mxu0 0.0
        %1446 = vmatprep.subr.mxu0 0.0
        %1447 = vmatpush1.msra.mxu0 0.0
        %1448 = vmatprep.subr.mxu0 0.0
        %1449 = vmatpush1.msra.mxu0 0.0
        %1450 = vmatprep.subr.mxu0 0.0
        %1451 = vmatpush1.msra.mxu0 0.0
        %1452 = vmatprep.subr.mxu0 0.0
        %1453 = vmatpush1.msra.mxu0 0.0
        %1454 = vmatprep.subr.mxu0 0.0
        %1455 = vmatpush1.msra.mxu0 0.0
        %1456 = vmatprep.subr.mxu0 0.0
        %1457 = vmatpush1.msra.mxu0 0.0
        %1458 = vmatprep.subr.mxu0 0.0
        %1459 = vmatpush1.msra.mxu0 0.0
        %1460 = vmatprep.subr.mxu0 0.0
        %1461 = vmatpush1.msra.mxu0 0.0
        %1462 = vmatprep.subr.mxu0 0.0
        %1463 = vmatpush1.msra.mxu0 0.0
        %1464 = vmatprep.subr.mxu0 0.0
        %1465 = vmatpush1.msra.mxu0 0.0
        %1466 = vmatprep.mubr.f32.mxu0 0.0
        %1467 = vmatmul.mubr.f32.gmra.mrb[0].mxu0 %v433
        %v1468 = vpop.f32.mrb[0].mxu0
        %v1469 = vadd.f32 %v1400, %v1468
        %v1470 = vpop.f32.mrb[0].mxu0
        %1471 = vmatprep.mubr.f32.mxu0 0.0
        %1472 = vmatmul.mubr.f32.gmra.mrb[0].mxu0 %v434
        %v1473 = vpop.f32.mrb[0].mxu0
        %v1474 = vadd.f32 %v1400, %v1473
        %v1475 = vpop.f32.mrb[0].mxu0
        %1476 = vmatprep.mubr.f32.mxu0 0.0
        %1477 = vmatmul.mubr.f32.gmra.mrb[0].mxu0 %v435
        %v1478 = vpop.f32.mrb[0].mxu0
        %v1479 = vadd.f32 %v1400, %v1478
        %v1480 = vpop.f32.mrb[0].mxu0
        %1481 = vmatprep.mubr.f32.mxu0 0.0
        %1482 = vmatmul.mubr.f32.gmra.mrb[0].mxu0 %v436
        %v1483 = vpop.f32.mrb[0].mxu0
        %v1484 = vadd.f32 %v1400, %v1483
        %v1485 = vpop.f32.mrb[0].mxu0
        %1486 = vmatprep.mubr.f32.mxu0 0.0
        %1487 = vmatmul.mubr.f32.gmra.mrb[0].mxu0 %v437
        %v1488 = vpop.f32.mrb[0].mxu0
        %v1489 = vadd.f32 %v1400, %v1488
        %v1490 = vpop.f32.mrb[0].mxu0
        %1491 = vmatprep.mubr.f32.mxu0 0.0
        %1492 = vmatmul.mubr.f32.gmra.mrb[0].mxu0 %v438
        %v1493 = vpop.f32.mrb[0].mxu0
        %v1494 = vadd.f32 %v1400, %v1493
        %v1495 = vpop.f32.mrb[0].mxu0
        %1496 = vmatprep.mubr.f32.mxu0 0.0
        %1497 = vmatmul.mubr.f32.gmra.mrb[0].mxu0 %v439
        %v1498 = vpop.f32.mrb[0].mxu0
        %v1499 = vadd.f32 %v1400, %v1498
        %v1500 = vpop.f32.mrb[0].mxu0
        %1501 = vmatprep.mubr.f32.mxu0 0.0
        %1502 = vmatmul.mubr.f32.gmra.mrb[0].mxu0 %v440
        %v1503 = vpop.f32.mrb[0].mxu0
        %v1504 = vadd.f32 %v1400, %v1503
        %v1505 = vpop.f32.mrb[0].mxu0
        %1506 = vmatprep.mubr.f32.mxu0 0.0
        %1507 = vmatmul.mubr.f32.gmra.mrb[0].mxu0 %v441
        %v1508 = vpop.f32.mrb[0].mxu0
        %v1509 = vadd.f32 %v1400, %v1508
        %v1510 = vpop.f32.mrb[0].mxu0
        %1511 = vmatprep.mubr.f32.mxu0 0.0
        %1512 = vmatmul.mubr.f32.gmra.mrb[0].mxu0 %v442
        %v1513 = vpop.f32.mrb[0].mxu0
        %v1514 = vadd.f32 %v1400, %v1513
        %v1515 = vpop.f32.mrb[0].mxu0
        %1516 = vmatprep.mubr.f32.mxu0 0.0
        %1517 = vmatmul.mubr.f32.gmra.mrb[0].mxu0 %v443
        %v1518 = vpop.f32.mrb[0].mxu0
        %v1519 = vadd.f32 %v1400, %v1518
        %v1520 = vpop.f32.mrb[0].mxu0
        %1521 = vmatprep.mubr.f32.mxu0 0.0
        %1522 = vmatmul.mubr.f32.gmra.mrb[0].mxu0 %v444
        %v1523 = vpop.f32.mrb[0].mxu0
        %v1524 = vadd.f32 %v1400, %v1523
        %v1525 = vpop.f32.mrb[0].mxu0
        %1526 = vmatprep.mubr.f32.mxu0 0.0
        %1527 = vmatmul.mubr.f32.gmra.mrb[0].mxu0 %v445
        %v1528 = vpop.f32.mrb[0].mxu0
        %v1529 = vadd.f32 %v1400, %v1528
        %v1530 = vpop.f32.mrb[0].mxu0
        %1531 = vmatprep.mubr.f32.mxu0 0.0
        %1532 = vmatmul.mubr.f32.gmra.mrb[0].mxu0 %v446
        %v1533 = vpop.f32.mrb[0].mxu0
        %v1534 = vadd.f32 %v1400, %v1533
        %v1535 = vpop.f32.mrb[0].mxu0
        %1536 = vmatprep.mubr.f32.mxu0 0.0
        %1537 = vmatmul.mubr.f32.gmra.mrb[0].mxu0 %v447
        %v1538 = vpop.f32.mrb[0].mxu0
        %v1539 = vadd.f32 %v1400, %v1538
        %v1540 = vpop.f32.mrb[0].mxu0
        %1541 = vmatprep.mubr.f32.mxu0 0.0
        %1542 = vmatmul.mubr.f32.gmra.mrb[0].mxu0 %v448
        %v1543 = vpop.f32.mrb[0].mxu0
        %v1544 = vadd.f32 %v1400, %v1543
        %v1545 = vpop.f32.mrb[0].mxu0
        %1546 = vdwg.mxu0
        %v1547 = vmax.f32 %v1469, 0.0
        %v1548 = vmax.f32 %v1474, 0.0
        %v1549 = vmax.f32 %v1479, 0.0
        %v1550 = vmax.f32 %v1484, 0.0
        %v1551 = vmax.f32 %v1489, 0.0
        %v1552 = vmax.f32 %v1494, 0.0
        %v1553 = vmax.f32 %v1499, 0.0
        %v1554 = vmax.f32 %v1504, 0.0
        %v1555 = vmax.f32 %v1509, 0.0
        %v1556 = vmax.f32 %v1514, 0.0
        %v1557 = vmax.f32 %v1519, 0.0
        %v1558 = vmax.f32 %v1524, 0.0
        %v1559 = vmax.f32 %v1529, 0.0
        %v1560 = vmax.f32 %v1534, 0.0
        %v1561 = vmax.f32 %v1539, 0.0
        %v1562 = vmax.f32 %v1544, 0.0
        %v1563 = vld [vmem:[#allocation5] sm:$0xff]
        %v1564 = vld [vmem:[#allocation5 + $0x8] sm:$0xff]
        %v1565 = vld [vmem:[#allocation5 + $0x10] sm:$0xff]
        %v1566 = vld [vmem:[#allocation5 + $0x18] sm:$0xff]
        %v1568 = vsel %vm836, %v1547, 0
        %v1571 = vsel %vm836, %v1548, 0
        %v1574 = vsel %vm836, %v1549, 0
        %v1577 = vsel %vm836, %v1550, 0
        %v1580 = vsel %vm836, %v1551, 0
        %v1583 = vsel %vm836, %v1552, 0
        %v1586 = vsel %vm836, %v1553, 0
        %v1589 = vsel %vm836, %v1554, 0
        %v1592 = vsel %vm836, %v1555, 0
        %v1595 = vsel %vm836, %v1556, 0
        %v1598 = vsel %vm836, %v1557, 0
        %v1601 = vsel %vm836, %v1558, 0
        %v1604 = vsel %vm836, %v1559, 0
        %v1607 = vsel %vm836, %v1560, 0
        %v1610 = vsel %vm836, %v1561, 0
        %v1613 = vsel %vm836, %v1562, 0
        %1615 = vmatprep.subr.mxu0 0.0
        %1616 = vmatpush1.msra.mxu0 %v1563
        %1617 = vmatprep.subr.mxu0 0.0
        %1618 = vmatpush1.msra.mxu0 %v1564
        %1619 = vmatprep.subr.mxu0 0.0
        %1620 = vmatpush1.msra.mxu0 %v1565
        %1621 = vmatprep.subr.mxu0 0.0
        %1622 = vmatpush1.msra.mxu0 %v1566
        %1623 = vmatprep.subr.mxu0 0.0
        %1624 = vmatpush1.msra.mxu0 0.0
        %1625 = vmatprep.subr.mxu0 0.0
        %1626 = vmatpush1.msra.mxu0 0.0
        %1627 = vmatprep.subr.mxu0 0.0
        %1628 = vmatpush1.msra.mxu0 0.0
        %1629 = vmatprep.subr.mxu0 0.0
        %1630 = vmatpush1.msra.mxu0 0.0
        %1631 = vmatprep.subr.mxu0 0.0
        %1632 = vmatpush1.msra.mxu0 0.0
        %1633 = vmatprep.subr.mxu0 0.0
        %1634 = vmatpush1.msra.mxu0 0.0
        %1635 = vmatprep.subr.mxu0 0.0
        %1636 = vmatpush1.msra.mxu0 0.0
        %1637 = vmatprep.subr.mxu0 0.0
        %1638 = vmatpush1.msra.mxu0 0.0
        %1639 = vmatprep.subr.mxu0 0.0
        %1640 = vmatpush1.msra.mxu0 0.0
        %1641 = vmatprep.subr.mxu0 0.0
        %1642 = vmatpush1.msra.mxu0 0.0
        %1643 = vmatprep.subr.mxu0 0.0
        %1644 = vmatpush1.msra.mxu0 0.0
        %1645 = vmatprep.subr.mxu0 0.0
        %1646 = vmatpush1.msra.mxu0 0.0
        %1647 = vmatprep.subr.mxu0 0.0
        %1648 = vmatpush1.msra.mxu0 0.0
        %1649 = vmatprep.subr.mxu0 0.0
        %1650 = vmatpush1.msra.mxu0 0.0
        %1651 = vmatprep.subr.mxu0 0.0
        %1652 = vmatpush1.msra.mxu0 0.0
        %1653 = vmatprep.subr.mxu0 0.0
        %1654 = vmatpush1.msra.mxu0 0.0
        %1655 = vmatprep.subr.mxu0 0.0
        %1656 = vmatpush1.msra.mxu0 0.0
        %1657 = vmatprep.subr.mxu0 0.0
        %1658 = vmatpush1.msra.mxu0 0.0
        %1659 = vmatprep.subr.mxu0 0.0
        %1660 = vmatpush1.msra.mxu0 0.0
        %1661 = vmatprep.subr.mxu0 0.0
        %1662 = vmatpush1.msra.mxu0 0.0
        %1663 = vmatprep.subr.mxu0 0.0
        %1664 = vmatpush1.msra.mxu0 0.0
        %1665 = vmatprep.subr.mxu0 0.0
        %1666 = vmatpush1.msra.mxu0 0.0
        %1667 = vmatprep.subr.mxu0 0.0
        %1668 = vmatpush1.msra.mxu0 0.0
        %1669 = vmatprep.subr.mxu0 0.0
        %1670 = vmatpush1.msra.mxu0 0.0
        %1671 = vmatprep.subr.mxu0 0.0
        %1672 = vmatpush1.msra.mxu0 0.0
        %1673 = vmatprep.subr.mxu0 0.0
        %1674 = vmatpush1.msra.mxu0 0.0
        %1675 = vmatprep.subr.mxu0 0.0
        %1676 = vmatpush1.msra.mxu0 0.0
        %1677 = vmatprep.subr.mxu0 0.0
        %1678 = vmatpush1.msra.mxu0 0.0
        %1679 = vmatprep.mubr.f32.mxu0 0.0
        %1680 = vmatmul.mubr.f32.gmra.mrb[0].mxu0 %v1568
        %v1681 = vpop.f32.mrb[0].mxu0
        %v1682 = vadd.f32 0.0, %v1681
        %v1683 = vpop.f32.mrb[0].mxu0
        %1684 = vmatprep.mubr.f32.mxu0 0.0
        %1685 = vmatmul.mubr.f32.gmra.mrb[0].mxu0 %v1571
        %v1686 = vpop.f32.mrb[0].mxu0
        %v1687 = vadd.f32 0.0, %v1686
        %v1688 = vpop.f32.mrb[0].mxu0
        %1689 = vmatprep.mubr.f32.mxu0 0.0
        %1690 = vmatmul.mubr.f32.gmra.mrb[0].mxu0 %v1574
        %v1691 = vpop.f32.mrb[0].mxu0
        %v1692 = vadd.f32 0.0, %v1691
        %v1693 = vpop.f32.mrb[0].mxu0
        %1694 = vmatprep.mubr.f32.mxu0 0.0
        %1695 = vmatmul.mubr.f32.gmra.mrb[0].mxu0 %v1577
        %v1696 = vpop.f32.mrb[0].mxu0
        %v1697 = vadd.f32 0.0, %v1696
        %v1698 = vpop.f32.mrb[0].mxu0
        %1699 = vmatprep.mubr.f32.mxu0 0.0
        %1700 = vmatmul.mubr.f32.gmra.mrb[0].mxu0 %v1580
        %v1701 = vpop.f32.mrb[0].mxu0
        %v1702 = vadd.f32 0.0, %v1701
        %v1703 = vpop.f32.mrb[0].mxu0
        %1704 = vmatprep.mubr.f32.mxu0 0.0
        %1705 = vmatmul.mubr.f32.gmra.mrb[0].mxu0 %v1583
        %v1706 = vpop.f32.mrb[0].mxu0
        %v1707 = vadd.f32 0.0, %v1706
        %v1708 = vpop.f32.mrb[0].mxu0
        %1709 = vmatprep.mubr.f32.mxu0 0.0
        %1710 = vmatmul.mubr.f32.gmra.mrb[0].mxu0 %v1586
        %v1711 = vpop.f32.mrb[0].mxu0
        %v1712 = vadd.f32 0.0, %v1711
        %v1713 = vpop.f32.mrb[0].mxu0
        %1714 = vmatprep.mubr.f32.mxu0 0.0
        %1715 = vmatmul.mubr.f32.gmra.mrb[0].mxu0 %v1589
        %v1716 = vpop.f32.mrb[0].mxu0
        %v1717 = vadd.f32 0.0, %v1716
        %v1718 = vpop.f32.mrb[0].mxu0
        %1719 = vmatprep.mubr.f32.mxu0 0.0
        %1720 = vmatmul.mubr.f32.gmra.mrb[0].mxu0 %v1592
        %v1721 = vpop.f32.mrb[0].mxu0
        %v1722 = vadd.f32 0.0, %v1721
        %v1723 = vpop.f32.mrb[0].mxu0
        %1724 = vmatprep.mubr.f32.mxu0 0.0
        %1725 = vmatmul.mubr.f32.gmra.mrb[0].mxu0 %v1595
        %v1726 = vpop.f32.mrb[0].mxu0
        %v1727 = vadd.f32 0.0, %v1726
        %v1728 = vpop.f32.mrb[0].mxu0
        %1729 = vmatprep.mubr.f32.mxu0 0.0
        %1730 = vmatmul.mubr.f32.gmra.mrb[0].mxu0 %v1598
        %v1731 = vpop.f32.mrb[0].mxu0
        %v1732 = vadd.f32 0.0, %v1731
        %v1733 = vpop.f32.mrb[0].mxu0
        %1734 = vmatprep.mubr.f32.mxu0 0.0
        %1735 = vmatmul.mubr.f32.gmra.mrb[0].mxu0 %v1601
        %v1736 = vpop.f32.mrb[0].mxu0
        %v1737 = vadd.f32 0.0, %v1736
        %v1738 = vpop.f32.mrb[0].mxu0
        %1739 = vmatprep.mubr.f32.mxu0 0.0
        %1740 = vmatmul.mubr.f32.gmra.mrb[0].mxu0 %v1604
        %v1741 = vpop.f32.mrb[0].mxu0
        %v1742 = vadd.f32 0.0, %v1741
        %v1743 = vpop.f32.mrb[0].mxu0
        %1744 = vmatprep.mubr.f32.mxu0 0.0
        %1745 = vmatmul.mubr.f32.gmra.mrb[0].mxu0 %v1607
        %v1746 = vpop.f32.mrb[0].mxu0
        %v1747 = vadd.f32 0.0, %v1746
        %v1748 = vpop.f32.mrb[0].mxu0
        %1749 = vmatprep.mubr.f32.mxu0 0.0
        %1750 = vmatmul.mubr.f32.gmra.mrb[0].mxu0 %v1610
        %v1751 = vpop.f32.mrb[0].mxu0
        %v1752 = vadd.f32 0.0, %v1751
        %v1753 = vpop.f32.mrb[0].mxu0
        %1754 = vmatprep.mubr.f32.mxu0 0.0
        %1755 = vmatmul.mubr.f32.gmra.mrb[0].mxu0 %v1613
        %v1756 = vpop.f32.mrb[0].mxu0
        %v1757 = vadd.f32 0.0, %v1756
        %v1758 = vpop.f32.mrb[0].mxu0
        %1759 = vdwg.mxu0
        %v1760 = vsel %vm836, %v1682, 0.0
        %v1761 = vrot.slane %v1760, 4
        %v1762 = vadd.f32 %v1760, %v1761
        %v1763 = vrot.slane %v1762, 2
        %v1764 = vadd.f32 %v1762, %v1763
        %v1765 = vrot.slane %v1764, 1
        %v1766 = vadd.f32 %v1764, %v1765
        %v1767 = vsel %vm836, %v1687, 0.0
        %v1768 = vrot.slane %v1767, 4
        %v1769 = vadd.f32 %v1767, %v1768
        %v1770 = vrot.slane %v1769, 2
        %v1771 = vadd.f32 %v1769, %v1770
        %v1772 = vrot.slane %v1771, 1
        %v1773 = vadd.f32 %v1771, %v1772
        %v1774 = vsel %vm836, %v1692, 0.0
        %v1775 = vrot.slane %v1774, 4
        %v1776 = vadd.f32 %v1774, %v1775
        %v1777 = vrot.slane %v1776, 2
        %v1778 = vadd.f32 %v1776, %v1777
        %v1779 = vrot.slane %v1778, 1
        %v1780 = vadd.f32 %v1778, %v1779
        %v1781 = vsel %vm836, %v1697, 0.0
        %v1782 = vrot.slane %v1781, 4
        %v1783 = vadd.f32 %v1781, %v1782
        %v1784 = vrot.slane %v1783, 2
        %v1785 = vadd.f32 %v1783, %v1784
        %v1786 = vrot.slane %v1785, 1
        %v1787 = vadd.f32 %v1785, %v1786
        %v1788 = vsel %vm836, %v1702, 0.0
        %v1789 = vrot.slane %v1788, 4
        %v1790 = vadd.f32 %v1788, %v1789
        %v1791 = vrot.slane %v1790, 2
        %v1792 = vadd.f32 %v1790, %v1791
        %v1793 = vrot.slane %v1792, 1
        %v1794 = vadd.f32 %v1792, %v1793
        %v1795 = vsel %vm836, %v1707, 0.0
        %v1796 = vrot.slane %v1795, 4
        %v1797 = vadd.f32 %v1795, %v1796
        %v1798 = vrot.slane %v1797, 2
        %v1799 = vadd.f32 %v1797, %v1798
        %v1800 = vrot.slane %v1799, 1
        %v1801 = vadd.f32 %v1799, %v1800
        %v1802 = vsel %vm836, %v1712, 0.0
        %v1803 = vrot.slane %v1802, 4
        %v1804 = vadd.f32 %v1802, %v1803
        %v1805 = vrot.slane %v1804, 2
        %v1806 = vadd.f32 %v1804, %v1805
        %v1807 = vrot.slane %v1806, 1
        %v1808 = vadd.f32 %v1806, %v1807
        %v1809 = vsel %vm836, %v1717, 0.0
        %v1810 = vrot.slane %v1809, 4
        %v1811 = vadd.f32 %v1809, %v1810
        %v1812 = vrot.slane %v1811, 2
        %v1813 = vadd.f32 %v1811, %v1812
        %v1814 = vrot.slane %v1813, 1
        %v1815 = vadd.f32 %v1813, %v1814
        %v1816 = vsel %vm836, %v1722, 0.0
        %v1817 = vrot.slane %v1816, 4
        %v1818 = vadd.f32 %v1816, %v1817
        %v1819 = vrot.slane %v1818, 2
        %v1820 = vadd.f32 %v1818, %v1819
        %v1821 = vrot.slane %v1820, 1
        %v1822 = vadd.f32 %v1820, %v1821
        %v1823 = vsel %vm836, %v1727, 0.0
        %v1824 = vrot.slane %v1823, 4
        %v1825 = vadd.f32 %v1823, %v1824
        %v1826 = vrot.slane %v1825, 2
        %v1827 = vadd.f32 %v1825, %v1826
        %v1828 = vrot.slane %v1827, 1
        %v1829 = vadd.f32 %v1827, %v1828
        %v1830 = vsel %vm836, %v1732, 0.0
        %v1831 = vrot.slane %v1830, 4
        %v1832 = vadd.f32 %v1830, %v1831
        %v1833 = vrot.slane %v1832, 2
        %v1834 = vadd.f32 %v1832, %v1833
        %v1835 = vrot.slane %v1834, 1
        %v1836 = vadd.f32 %v1834, %v1835
        %v1837 = vsel %vm836, %v1737, 0.0
        %v1838 = vrot.slane %v1837, 4
        %v1839 = vadd.f32 %v1837, %v1838
        %v1840 = vrot.slane %v1839, 2
        %v1841 = vadd.f32 %v1839, %v1840
        %v1842 = vrot.slane %v1841, 1
        %v1843 = vadd.f32 %v1841, %v1842
        %v1844 = vsel %vm836, %v1742, 0.0
        %v1845 = vrot.slane %v1844, 4
        %v1846 = vadd.f32 %v1844, %v1845
        %v1847 = vrot.slane %v1846, 2
        %v1848 = vadd.f32 %v1846, %v1847
        %v1849 = vrot.slane %v1848, 1
        %v1850 = vadd.f32 %v1848, %v1849
        %v1851 = vsel %vm836, %v1747, 0.0
        %v1852 = vrot.slane %v1851, 4
        %v1853 = vadd.f32 %v1851, %v1852
        %v1854 = vrot.slane %v1853, 2
        %v1855 = vadd.f32 %v1853, %v1854
        %v1856 = vrot.slane %v1855, 1
        %v1857 = vadd.f32 %v1855, %v1856
        %v1858 = vsel %vm836, %v1752, 0.0
        %v1859 = vrot.slane %v1858, 4
        %v1860 = vadd.f32 %v1858, %v1859
        %v1861 = vrot.slane %v1860, 2
        %v1862 = vadd.f32 %v1860, %v1861
        %v1863 = vrot.slane %v1862, 1
        %v1864 = vadd.f32 %v1862, %v1863
        %v1865 = vsel %vm836, %v1757, 0.0
        %v1866 = vrot.slane %v1865, 4
        %v1867 = vadd.f32 %v1865, %v1866
        %v1868 = vrot.slane %v1867, 2
        %v1869 = vadd.f32 %v1867, %v1868
        %v1870 = vrot.slane %v1869, 1
        %v1871 = vadd.f32 %v1869, %v1870
        %v1872 = vrcp.pop 8.0
        %v1873 = vmul.f32 %v1766, %v1872
        %v1874 = vmul.f32 %v1773, %v1872
        %v1875 = vmul.f32 %v1780, %v1872
        %v1876 = vmul.f32 %v1787, %v1872
        %v1877 = vmul.f32 %v1794, %v1872
        %v1878 = vmul.f32 %v1801, %v1872
        %v1879 = vmul.f32 %v1808, %v1872
        %v1880 = vmul.f32 %v1815, %v1872
        %v1881 = vmul.f32 %v1822, %v1872
        %v1882 = vmul.f32 %v1829, %v1872
        %v1883 = vmul.f32 %v1836, %v1872
        %v1884 = vmul.f32 %v1843, %v1872
        %v1885 = vmul.f32 %v1850, %v1872
        %v1886 = vmul.f32 %v1857, %v1872
        %v1887 = vmul.f32 %v1864, %v1872
        %v1888 = vmul.f32 %v1871, %v1872
        %v1889 = vtanh.pop %v1873
        %v1890 = vtanh.pop %v1874
        %v1891 = vtanh.pop %v1875
        %v1892 = vtanh.pop %v1876
        %v1893 = vtanh.pop %v1877
        %v1894 = vtanh.pop %v1878
        %v1895 = vtanh.pop %v1879
        %v1896 = vtanh.pop %v1880
        %v1897 = vtanh.pop %v1881
        %v1898 = vtanh.pop %v1882
        %v1899 = vtanh.pop %v1883
        %v1900 = vtanh.pop %v1884
        %v1901 = vtanh.pop %v1885
        %v1902 = vtanh.pop %v1886
        %v1903 = vtanh.pop %v1887
        %v1904 = vtanh.pop %v1888
        %v1905 = vmul.f32 %v1547, %v1889
        %v1906 = vmul.f32 %v1548, %v1890
        %v1907 = vmul.f32 %v1549, %v1891
        %v1908 = vmul.f32 %v1550, %v1892
        %v1909 = vmul.f32 %v1551, %v1893
        %v1910 = vmul.f32 %v1552, %v1894
        %v1911 = vmul.f32 %v1553, %v1895
        %v1912 = vmul.f32 %v1554, %v1896
        %v1913 = vmul.f32 %v1555, %v1897
        %v1914 = vmul.f32 %v1556, %v1898
        %v1915 = vmul.f32 %v1557, %v1899
        %v1916 = vmul.f32 %v1558, %v1900
        %v1917 = vmul.f32 %v1559, %v1901
        %v1918 = vmul.f32 %v1560, %v1902
        %v1919 = vmul.f32 %v1561, %v1903
        %v1920 = vmul.f32 %v1562, %v1904
        %v1921 = vsel %vm836, %v1905, 0.0
        %1922 = vadd.xlane.f32.xlu0 %v1921
        %v1923 = vpop.xlane.xlu0 %1922
        %v1924 = vsel %vm836, %v1906, 0.0
        %1925 = vadd.xlane.f32.xlu0 %v1924
        %v1926 = vpop.xlane.xlu0 %1925
        %v1927 = vsel %vm836, %v1907, 0.0
        %1928 = vadd.xlane.f32.xlu0 %v1927
        %v1929 = vpop.xlane.xlu0 %1928
        %v1930 = vsel %vm836, %v1908, 0.0
        %1931 = vadd.xlane.f32.xlu0 %v1930
        %v1932 = vpop.xlane.xlu0 %1931
        %v1933 = vsel %vm836, %v1909, 0.0
        %1934 = vadd.xlane.f32.xlu0 %v1933
        %v1935 = vpop.xlane.xlu0 %1934
        %v1936 = vsel %vm836, %v1910, 0.0
        %1937 = vadd.xlane.f32.xlu0 %v1936
        %v1938 = vpop.xlane.xlu0 %1937
        %v1939 = vsel %vm836, %v1911, 0.0
        %1940 = vadd.xlane.f32.xlu0 %v1939
        %v1941 = vpop.xlane.xlu0 %1940
        %v1942 = vsel %vm836, %v1912, 0.0
        %1943 = vadd.xlane.f32.xlu0 %v1942
        %v1944 = vpop.xlane.xlu0 %1943
        %v1945 = vsel %vm836, %v1913, 0.0
        %1946 = vadd.xlane.f32.xlu0 %v1945
        %v1947 = vpop.xlane.xlu0 %1946
        %v1948 = vsel %vm836, %v1914, 0.0
        %1949 = vadd.xlane.f32.xlu0 %v1948
        %v1950 = vpop.xlane.xlu0 %1949
        %v1951 = vsel %vm836, %v1915, 0.0
        %1952 = vadd.xlane.f32.xlu0 %v1951
        %v1953 = vpop.xlane.xlu0 %1952
        %v1954 = vsel %vm836, %v1916, 0.0
        %1955 = vadd.xlane.f32.xlu0 %v1954
        %v1956 = vpop.xlane.xlu0 %1955
        %v1957 = vsel %vm836, %v1917, 0.0
        %1958 = vadd.xlane.f32.xlu0 %v1957
        %v1959 = vpop.xlane.xlu0 %1958
        %v1960 = vsel %vm836, %v1918, 0.0
        %1961 = vadd.xlane.f32.xlu0 %v1960
        %v1962 = vpop.xlane.xlu0 %1961
        %v1963 = vsel %vm836, %v1919, 0.0
        %1964 = vadd.xlane.f32.xlu0 %v1963
        %v1965 = vpop.xlane.xlu0 %1964
        %v1966 = vsel %vm836, %v1920, 0.0
        %1967 = vadd.xlane.f32.xlu0 %v1966
        %v1968 = vpop.xlane.xlu0 %1967
        %v1969 = vxor.u32 %v1923, 2147483648
        %v1970 = vxor.u32 %v1926, 2147483648
        %v1971 = vxor.u32 %v1929, 2147483648
        %v1972 = vxor.u32 %v1932, 2147483648
        %v1973 = vxor.u32 %v1935, 2147483648
        %v1974 = vxor.u32 %v1938, 2147483648
        %v1975 = vxor.u32 %v1941, 2147483648
        %v1976 = vxor.u32 %v1944, 2147483648
        %v1977 = vxor.u32 %v1947, 2147483648
        %v1978 = vxor.u32 %v1950, 2147483648
        %v1979 = vxor.u32 %v1953, 2147483648
        %v1980 = vxor.u32 %v1956, 2147483648
        %v1981 = vxor.u32 %v1959, 2147483648
        %v1982 = vxor.u32 %v1962, 2147483648
        %v1983 = vxor.u32 %v1965, 2147483648
        %v1984 = vxor.u32 %v1968, 2147483648
        %v1985 = vmul.f32 %v1969, 1.442695
        %v1986 = vpow.pop %v1985
        %v1987 = vmul.f32 %v1970, 1.442695
        %v1988 = vpow.pop %v1987
        %v1989 = vmul.f32 %v1971, 1.442695
        %v1990 = vpow.pop %v1989
        %v1991 = vmul.f32 %v1972, 1.442695
        %v1992 = vpow.pop %v1991
        %v1993 = vmul.f32 %v1973, 1.442695
        %v1994 = vpow.pop %v1993
        %v1995 = vmul.f32 %v1974, 1.442695
        %v1996 = vpow.pop %v1995
        %v1997 = vmul.f32 %v1975, 1.442695
        %v1998 = vpow.pop %v1997
        %v1999 = vmul.f32 %v1976, 1.442695
        %v2000 = vpow.pop %v1999
        %v2001 = vmul.f32 %v1977, 1.442695
        %v2002 = vpow.pop %v2001
        %v2003 = vmul.f32 %v1978, 1.442695
        %v2004 = vpow.pop %v2003
        %v2005 = vmul.f32 %v1979, 1.442695
        %v2006 = vpow.pop %v2005
        %v2007 = vmul.f32 %v1980, 1.442695
        %v2008 = vpow.pop %v2007
        %v2009 = vmul.f32 %v1981, 1.442695
        %v2010 = vpow.pop %v2009
        %v2011 = vmul.f32 %v1982, 1.442695
        %v2012 = vpow.pop %v2011
        %v2013 = vmul.f32 %v1983, 1.442695
        %v2014 = vpow.pop %v2013
        %v2015 = vmul.f32 %v1984, 1.442695
        %v2016 = vpow.pop %v2015
        %v2017 = vadd.f32 %v1986, 1.0
        %v2018 = vadd.f32 %v1988, 1.0
        %v2019 = vadd.f32 %v1990, 1.0
        %v2020 = vadd.f32 %v1992, 1.0
        %v2021 = vadd.f32 %v1994, 1.0
        %v2022 = vadd.f32 %v1996, 1.0
        %v2023 = vadd.f32 %v1998, 1.0
        %v2024 = vadd.f32 %v2000, 1.0
        %v2025 = vadd.f32 %v2002, 1.0
        %v2026 = vadd.f32 %v2004, 1.0
        %v2027 = vadd.f32 %v2006, 1.0
        %v2028 = vadd.f32 %v2008, 1.0
        %v2029 = vadd.f32 %v2010, 1.0
        %v2030 = vadd.f32 %v2012, 1.0
        %v2031 = vadd.f32 %v2014, 1.0
        %v2032 = vadd.f32 %v2016, 1.0
        %v2033 = vrcp.pop %v2017
        %v2034 = vmul.f32 1.0, %v2033
        %v2035 = vrcp.pop %v2018
        %v2036 = vmul.f32 1.0, %v2035
        %v2037 = vrcp.pop %v2019
        %v2038 = vmul.f32 1.0, %v2037
        %v2039 = vrcp.pop %v2020
        %v2040 = vmul.f32 1.0, %v2039
        %v2041 = vrcp.pop %v2021
        %v2042 = vmul.f32 1.0, %v2041
        %v2043 = vrcp.pop %v2022
        %v2044 = vmul.f32 1.0, %v2043
        %v2045 = vrcp.pop %v2023
        %v2046 = vmul.f32 1.0, %v2045
        %v2047 = vrcp.pop %v2024
        %v2048 = vmul.f32 1.0, %v2047
        %v2049 = vrcp.pop %v2025
        %v2050 = vmul.f32 1.0, %v2049
        %v2051 = vrcp.pop %v2026
        %v2052 = vmul.f32 1.0, %v2051
        %v2053 = vrcp.pop %v2027
        %v2054 = vmul.f32 1.0, %v2053
        %v2055 = vrcp.pop %v2028
        %v2056 = vmul.f32 1.0, %v2055
        %v2057 = vrcp.pop %v2029
        %v2058 = vmul.f32 1.0, %v2057
        %v2059 = vrcp.pop %v2030
        %v2060 = vmul.f32 1.0, %v2059
        %v2061 = vrcp.pop %v2031
        %v2062 = vmul.f32 1.0, %v2061
        %v2063 = vrcp.pop %v2032
        %v2064 = vmul.f32 1.0, %v2063
        %v2065 = vmul.f32 %v2034, %v1547
        %v2066 = vmul.f32 %v2036, %v1548
        %v2067 = vmul.f32 %v2038, %v1549
        %v2068 = vmul.f32 %v2040, %v1550
        %v2069 = vmul.f32 %v2042, %v1551
        %v2070 = vmul.f32 %v2044, %v1552
        %v2071 = vmul.f32 %v2046, %v1553
        %v2072 = vmul.f32 %v2048, %v1554
        %v2073 = vmul.f32 %v2050, %v1555
        %v2074 = vmul.f32 %v2052, %v1556
        %v2075 = vmul.f32 %v2054, %v1557
        %v2076 = vmul.f32 %v2056, %v1558
        %v2077 = vmul.f32 %v2058, %v1559
        %v2078 = vmul.f32 %v2060, %v1560
        %v2079 = vmul.f32 %v2062, %v1561
        %v2080 = vmul.f32 %v2064, %v1562
        %v2081 = vsel %vm836, %v2065, 0.0
        %v2082 = vrot.slane %v2081, 4
        %v2083 = vadd.f32 %v2081, %v2082
        %v2084 = vrot.slane %v2083, 2
        %v2085 = vadd.f32 %v2083, %v2084
        %v2086 = vrot.slane %v2085, 1
        %v2087 = vadd.f32 %v2085, %v2086
        %v2088 = vsel %vm836, %v2066, 0.0
        %v2089 = vrot.slane %v2088, 4
        %v2090 = vadd.f32 %v2088, %v2089
        %v2091 = vrot.slane %v2090, 2
        %v2092 = vadd.f32 %v2090, %v2091
        %v2093 = vrot.slane %v2092, 1
        %v2094 = vadd.f32 %v2092, %v2093
        %v2095 = vsel %vm836, %v2067, 0.0
        %v2096 = vrot.slane %v2095, 4
        %v2097 = vadd.f32 %v2095, %v2096
        %v2098 = vrot.slane %v2097, 2
        %v2099 = vadd.f32 %v2097, %v2098
        %v2100 = vrot.slane %v2099, 1
        %v2101 = vadd.f32 %v2099, %v2100
        %v2102 = vsel %vm836, %v2068, 0.0
        %v2103 = vrot.slane %v2102, 4
        %v2104 = vadd.f32 %v2102, %v2103
        %v2105 = vrot.slane %v2104, 2
        %v2106 = vadd.f32 %v2104, %v2105
        %v2107 = vrot.slane %v2106, 1
        %v2108 = vadd.f32 %v2106, %v2107
        %v2109 = vsel %vm836, %v2069, 0.0
        %v2110 = vrot.slane %v2109, 4
        %v2111 = vadd.f32 %v2109, %v2110
        %v2112 = vrot.slane %v2111, 2
        %v2113 = vadd.f32 %v2111, %v2112
        %v2114 = vrot.slane %v2113, 1
        %v2115 = vadd.f32 %v2113, %v2114
        %v2116 = vsel %vm836, %v2070, 0.0
        %v2117 = vrot.slane %v2116, 4
        %v2118 = vadd.f32 %v2116, %v2117
        %v2119 = vrot.slane %v2118, 2
        %v2120 = vadd.f32 %v2118, %v2119
        %v2121 = vrot.slane %v2120, 1
        %v2122 = vadd.f32 %v2120, %v2121
        %v2123 = vsel %vm836, %v2071, 0.0
        %v2124 = vrot.slane %v2123, 4
        %v2125 = vadd.f32 %v2123, %v2124
        %v2126 = vrot.slane %v2125, 2
        %v2127 = vadd.f32 %v2125, %v2126
        %v2128 = vrot.slane %v2127, 1
        %v2129 = vadd.f32 %v2127, %v2128
        %v2130 = vsel %vm836, %v2072, 0.0
        %v2131 = vrot.slane %v2130, 4
        %v2132 = vadd.f32 %v2130, %v2131
        %v2133 = vrot.slane %v2132, 2
        %v2134 = vadd.f32 %v2132, %v2133
        %v2135 = vrot.slane %v2134, 1
        %v2136 = vadd.f32 %v2134, %v2135
        %v2137 = vsel %vm836, %v2073, 0.0
        %v2138 = vrot.slane %v2137, 4
        %v2139 = vadd.f32 %v2137, %v2138
        %v2140 = vrot.slane %v2139, 2
        %v2141 = vadd.f32 %v2139, %v2140
        %v2142 = vrot.slane %v2141, 1
        %v2143 = vadd.f32 %v2141, %v2142
        %v2144 = vsel %vm836, %v2074, 0.0
        %v2145 = vrot.slane %v2144, 4
        %v2146 = vadd.f32 %v2144, %v2145
        %v2147 = vrot.slane %v2146, 2
        %v2148 = vadd.f32 %v2146, %v2147
        %v2149 = vrot.slane %v2148, 1
        %v2150 = vadd.f32 %v2148, %v2149
        %v2151 = vsel %vm836, %v2075, 0.0
        %v2152 = vrot.slane %v2151, 4
        %v2153 = vadd.f32 %v2151, %v2152
        %v2154 = vrot.slane %v2153, 2
        %v2155 = vadd.f32 %v2153, %v2154
        %v2156 = vrot.slane %v2155, 1
        %v2157 = vadd.f32 %v2155, %v2156
        %v2158 = vsel %vm836, %v2076, 0.0
        %v2159 = vrot.slane %v2158, 4
        %v2160 = vadd.f32 %v2158, %v2159
        %v2161 = vrot.slane %v2160, 2
        %v2162 = vadd.f32 %v2160, %v2161
        %v2163 = vrot.slane %v2162, 1
        %v2164 = vadd.f32 %v2162, %v2163
        %v2165 = vsel %vm836, %v2077, 0.0
        %v2166 = vrot.slane %v2165, 4
        %v2167 = vadd.f32 %v2165, %v2166
        %v2168 = vrot.slane %v2167, 2
        %v2169 = vadd.f32 %v2167, %v2168
        %v2170 = vrot.slane %v2169, 1
        %v2171 = vadd.f32 %v2169, %v2170
        %v2172 = vsel %vm836, %v2078, 0.0
        %v2173 = vrot.slane %v2172, 4
        %v2174 = vadd.f32 %v2172, %v2173
        %v2175 = vrot.slane %v2174, 2
        %v2176 = vadd.f32 %v2174, %v2175
        %v2177 = vrot.slane %v2176, 1
        %v2178 = vadd.f32 %v2176, %v2177
        %v2179 = vsel %vm836, %v2079, 0.0
        %v2180 = vrot.slane %v2179, 4
        %v2181 = vadd.f32 %v2179, %v2180
        %v2182 = vrot.slane %v2181, 2
        %v2183 = vadd.f32 %v2181, %v2182
        %v2184 = vrot.slane %v2183, 1
        %v2185 = vadd.f32 %v2183, %v2184
        %v2186 = vsel %vm836, %v2080, 0.0
        %v2187 = vrot.slane %v2186, 4
        %v2188 = vadd.f32 %v2186, %v2187
        %v2189 = vrot.slane %v2188, 2
        %v2190 = vadd.f32 %v2188, %v2189
        %v2191 = vrot.slane %v2190, 1
        %v2192 = vadd.f32 %v2190, %v2191
        %v2193 = vld [vmem:[%s9] sm:$0xff]
        %v2194 = vld [vmem:[%s9 + $0x8] sm:$0xff]
        %v2195 = vld [vmem:[%s9 + $0x10] sm:$0xff]
        %v2196 = vld [vmem:[%s9 + $0x18] sm:$0xff]
        %v2197 = vld [vmem:[%s10] sm:$0x1]
        %v2199 = vlaneseq
        %v2200 = vshrl.u32 %v2199, 7
        %v2201 = vsub.s32 0, %v2200
        %v2202 = vrot.slane %v2197, %v2201
        %vm2220 = vcmask 1041409
        %v2221 = vsel %vm2220, %v2094, %v2087
        %vm2222 = vcmask 1042434
        %v2223 = vsel %vm2222, %v2101, %v2221
        %vm2224 = vcmask 1043459
        %v2225 = vsel %vm2224, %v2108, %v2223
        %vm2226 = vcmask 1044484
        %v2227 = vsel %vm2226, %v2115, %v2225
        %vm2228 = vcmask 1045509
        %v2229 = vsel %vm2228, %v2122, %v2227
        %vm2230 = vcmask 1046534
        %v2231 = vsel %vm2230, %v2129, %v2229
        %vm2232 = vcmask 1047559
        %v2233 = vsel %vm2232, %v2136, %v2231
        %v2234 = vsel %vm2220, %v2150, %v2143
        %v2235 = vsel %vm2222, %v2157, %v2234
        %v2236 = vsel %vm2224, %v2164, %v2235
        %v2237 = vsel %vm2226, %v2171, %v2236
        %v2238 = vsel %vm2228, %v2178, %v2237
        %v2239 = vsel %vm2230, %v2185, %v2238
        %v2240 = vsel %vm2232, %v2192, %v2239
        %v2241 = vsel %vm836, %v2233, 0
        %v2243 = vsel %vm836, %v2240, 0
        %2245 = vmatprep.subr.mxu0 0.0
        %2246 = vmatpush1.msra.mxu0 %v2193
        %2247 = vmatprep.subr.mxu0 0.0
        %2248 = vmatpush1.msra.mxu0 %v2194
        %2249 = vmatprep.subr.mxu0 0.0
        %2250 = vmatpush1.msra.mxu0 %v2195
        %2251 = vmatprep.subr.mxu0 0.0
        %2252 = vmatpush1.msra.mxu0 %v2196
        %2253 = vmatprep.subr.mxu0 0.0
        %2254 = vmatpush1.msra.mxu0 0.0
        %2255 = vmatprep.subr.mxu0 0.0
        %2256 = vmatpush1.msra.mxu0 0.0
        %2257 = vmatprep.subr.mxu0 0.0
        %2258 = vmatpush1.msra.mxu0 0.0
        %2259 = vmatprep.subr.mxu0 0.0
        %2260 = vmatpush1.msra.mxu0 0.0
        %2261 = vmatprep.subr.mxu0 0.0
        %2262 = vmatpush1.msra.mxu0 0.0
        %2263 = vmatprep.subr.mxu0 0.0
        %2264 = vmatpush1.msra.mxu0 0.0
        %2265 = vmatprep.subr.mxu0 0.0
        %2266 = vmatpush1.msra.mxu0 0.0
        %2267 = vmatprep.subr.mxu0 0.0
        %2268 = vmatpush1.msra.mxu0 0.0
        %2269 = vmatprep.subr.mxu0 0.0
        %2270 = vmatpush1.msra.mxu0 0.0
        %2271 = vmatprep.subr.mxu0 0.0
        %2272 = vmatpush1.msra.mxu0 0.0
        %2273 = vmatprep.subr.mxu0 0.0
        %2274 = vmatpush1.msra.mxu0 0.0
        %2275 = vmatprep.subr.mxu0 0.0
        %2276 = vmatpush1.msra.mxu0 0.0
        %2277 = vmatprep.subr.mxu0 0.0
        %2278 = vmatpush1.msra.mxu0 0.0
        %2279 = vmatprep.subr.mxu0 0.0
        %2280 = vmatpush1.msra.mxu0 0.0
        %2281 = vmatprep.subr.mxu0 0.0
        %2282 = vmatpush1.msra.mxu0 0.0
        %2283 = vmatprep.subr.mxu0 0.0
        %2284 = vmatpush1.msra.mxu0 0.0
        %2285 = vmatprep.subr.mxu0 0.0
        %2286 = vmatpush1.msra.mxu0 0.0
        %2287 = vmatprep.subr.mxu0 0.0
        %2288 = vmatpush1.msra.mxu0 0.0
        %2289 = vmatprep.subr.mxu0 0.0
        %2290 = vmatpush1.msra.mxu0 0.0
        %2291 = vmatprep.subr.mxu0 0.0
        %2292 = vmatpush1.msra.mxu0 0.0
        %2293 = vmatprep.subr.mxu0 0.0
        %2294 = vmatpush1.msra.mxu0 0.0
        %2295 = vmatprep.subr.mxu0 0.0
        %2296 = vmatpush1.msra.mxu0 0.0
        %2297 = vmatprep.subr.mxu0 0.0
        %2298 = vmatpush1.msra.mxu0 0.0
        %2299 = vmatprep.subr.mxu0 0.0
        %2300 = vmatpush1.msra.mxu0 0.0
        %2301 = vmatprep.subr.mxu0 0.0
        %2302 = vmatpush1.msra.mxu0 0.0
        %2303 = vmatprep.subr.mxu0 0.0
        %2304 = vmatpush1.msra.mxu0 0.0
        %2305 = vmatprep.subr.mxu0 0.0
        %2306 = vmatpush1.msra.mxu0 0.0
        %2307 = vmatprep.subr.mxu0 0.0
        %2308 = vmatpush1.msra.mxu0 0.0
        %2309 = vmatprep.mubr.f32.mxu0 0.0
        %2310 = vmatmul.mubr.f32.gmra.mrb[0].mxu0 %v2241
        %v2311 = vpop.f32.mrb[0].mxu0
        %v2312 = vadd.f32 %v2202, %v2311
        %v2313 = vpop.f32.mrb[0].mxu0
        %2314 = vmatprep.mubr.f32.mxu0 0.0
        %2315 = vmatmul.mubr.f32.gmra.mrb[0].mxu0 %v2243
        %v2316 = vpop.f32.mrb[0].mxu0
        %v2317 = vadd.f32 %v2202, %v2316
        %v2318 = vpop.f32.mrb[0].mxu0
        %2319 = vdwg.mxu0
        %v2320 = vmax.f32 %v2312, 0.0
        %v2321 = vmax.f32 %v2317, 0.0
        %vm2322 = vcmask 130048
        %2323 = vst.msk [vmem:[%s422] sm:$0xff] %vm2322, %v2320
        %2324 = vst.msk [vmem:[%s422 + $0x8] sm:$0xff] %vm2322, %v2321
        %s2325 = sand.u32 %s276, 1
        %s2326 = scalar_lea.sflag [#allocation4], %s2325
        %s2327 = sand.u32 %s276, 1
        %s2328 = smul.addr %s2327, 16
        %s2329 = scalar_lea.vmem [#allocation7], %s2328
        // Predicated region
        $region73: #{tpu_custom_call.1} parent=63 // pred_check
          %p2330 = pneg %p286
        $region74: #{tpu_custom_call.1} parent=63 // pred_check_branch
          %2332 = sbr.rel (%p2330) target = $region76
        $region75: #{tpu_custom_call.1} parent=63 // pred_region
          %s2334 = ssub.s32 256, 256
          %2335 = vsyncadd %s2326, %s2334
          %s2336 = smul.addr %s27, 2
          %s2337 = smul.addr %s2336, 128
          %s2338 = scalar_lea.hbm %s11, %s2337
          %s2339 = sshll.u32 %s2329, 4
          %s2340 = int_to_ptr.vmem [resolvable:$true] %s2339
          %2345 = dma.vmem_to_hbm [thread:$0]  %s2340, 256, %s2338, %s2326, 128, 128, 8
        $region76: #{tpu_custom_call.1} parent=63 // pred_fallthru
          _
      $region64: #{tpu_custom_call.1} parent=5 // pred_fallthru
        _
      %p2346 = scmp.le.s32.totalorder 2, %s22
      // Predicated region
      $region77: #{tpu_custom_call.1} parent=5 // pred_check
        %p2347 = pneg %p2346
      $region78: #{tpu_custom_call.1} parent=5 // pred_check_branch
        %2349 = sbr.rel (%p2347) target = $region80
      $region79: #{tpu_custom_call.1} parent=5 // pred_region
        %s2350 = ssub.s32 %s22, 2
        // Predicated region
        $region81: #{tpu_custom_call.1} parent=79 // pred_check
          %p2351 = pneg %p292
        $region82: #{tpu_custom_call.1} parent=79 // pred_check_branch
          %2353 = sbr.rel (%p2351) target = $region84
        $region83: #{tpu_custom_call.1} parent=79 // pred_region
          %s2354 = sand.u32 %s277, 1
          %s2355 = scalar_lea.sflag [#allocation4], %s2354
          %s2356 = sand.u32 %s277, 1
          %s2357 = smul.addr %s2356, 16
          %s2358 = scalar_lea.vmem [#allocation7], %s2357
          %2359 = dma.done %s2355, 256
        $region84: #{tpu_custom_call.1} parent=79 // pred_fallthru
          _
      $region80: #{tpu_custom_call.1} parent=5 // pred_fallthru
        _
    $region6: #{tpu_custom_call.1} parent=1 // loop_footer
      %s26 = sadd.s32 1, %s22
    $region7: #{tpu_custom_call.1} parent=1 // loop_footer_branch
      %21 = sbr.rel target = $region3
    $region8: #{tpu_custom_call.1} parent=1 // loop_exit
      _
    %2360 = vsyncpa [#allocation3], 1
    %s2361 = scalar_lea.sflag [#allocation3], 1
    %2362 = vsyncpa %s2361, 1
    %2363 = vsyncpa [#allocation6], 1
    %2364 = vsyncpa [#allocation4], 1
    %s2365 = scalar_lea.sflag [#allocation4], 1
    %2366 = vsyncpa %s2365, 1

</llo_original>
